<compile_context>
chip_gen: v6e
topology: v6e:2x2x1
jax: 0.10.0
libtpu: 0.0.40
codegen_flags: <defaults>
</compile_context>

<pallas_src>
import functools

import jax
import jax.numpy as jnp
from jax.experimental import pallas as pl
from jax.experimental.pallas import tpu as pltpu


def _conv_stats_kernel(x_ref, w_ref, y_ref, s_ref, *, rate, th, wd, cin, cout):
    """Dilated 3x3 conv for one (n, h-tile) block + fused partial BN stats.

    x_ref: (1, H+2r, W+2r, Cin) bf16   padded image of batch element n
                                       (block index depends only on n -> DMA'd
                                        once per n, reused across h-tiles)
    w_ref: (3, 3, Cin, Cout)    bf16   conv weights, tap-major
    y_ref: (1, th*W, Cout)      bf16   conv output tile (bias-free; BN cancels it)
    s_ref: (1, 2, Cout)         f32    per-tile [sum, sum_of_squares] over th*W
    """
    h = pl.program_id(1)
    row0 = pl.multiple_of(h * th, th)

    # Nine accumulating MXU dots (K = Cin each), f32 accumulation.
    acc = jnp.zeros((th * wd, cout), jnp.float32)
    for kh in range(3):
        for kw in range(3):
            xs = x_ref[0, pl.ds(row0 + kh * rate, th),
                       kw * rate:kw * rate + wd, :]          # (th, W, Cin) bf16
            xs = xs.reshape(th * wd, cin)                    # merge leading dims
            acc = acc + jnp.dot(xs, w_ref[kh, kw],
                                preferred_element_type=jnp.float32)

    y_ref[0] = acc.astype(y_ref.dtype)

    # Partial BatchNorm statistics fused into the conv pass (stay f32).
    s_ref[0, 0:1, :] = jnp.sum(acc, axis=0, keepdims=True)
    s_ref[0, 1:2, :] = jnp.sum(acc * acc, axis=0, keepdims=True)


def _pick_block_h(H, N, cap=256):
    """Largest divisor of H up to `cap`; if N == 1, keep >= 2 h-tiles so both
    v7x TensorCores get work."""
    cap = min(cap, H)
    if N == 1 and H > 1:
        cap = min(cap, max(H // 2, 1))
    for th in range(cap, 0, -1):
        if H % th == 0:
            return th
    return H


def atrous_module_forward(x_nchw, w_oihw, bias, gamma, beta, *, rate, eps=1e-5,
                          block_h=None):
    """Equivalent of Atrous_module.forward for a freshly-constructed module
    (BatchNorm2d in training mode: batch statistics, biased variance)."""
    N, Cin, H, W = x_nchw.shape
    Cout = w_oihw.shape[0]

    # Conv bias is a mathematical no-op under training-mode BN (mean subtraction
    # cancels any per-channel constant; variance is shift-invariant) -> drop it.
    del bias

    th = block_h if block_h is not None else _pick_block_h(H, N)
    assert H % th == 0
    hg = H // th
    Hp, Wp = H + 2 * rate, W + 2 * rate

    # NCHW -> NHWC (channels on the lane axis), zero-pad spatially, cast the MXU
    # inputs to bf16 (accumulation stays f32 inside the kernel).
    x_nhwc = jnp.transpose(x_nchw, (0, 2, 3, 1))
    x_pad = jnp.pad(x_nhwc, ((0, 0), (rate, rate), (rate, rate), (0, 0)))
    x_pad = x_pad.astype(jnp.bfloat16)

    # OIHW -> (kh, kw, Cin, Cout), bf16.
    w4 = jnp.transpose(w_oihw, (2, 3, 1, 0)).astype(jnp.bfloat16)

    cparams = pltpu.CompilerParams(
        dimension_semantics=("parallel", "parallel"),
        vmem_limit_bytes=64 * 1024 * 1024,   # <= physical VMEM on v5e/v6e/v7x
    )

    kernel = functools.partial(_conv_stats_kernel,
                               rate=rate, th=th, wd=W, cin=Cin, cout=Cout)
    conv_out, stats = pl.pallas_call(
        kernel,
        grid=(N, hg),
        in_specs=[
            pl.BlockSpec((1, Hp, Wp, Cin), lambda n, h: (n, 0, 0, 0)),
            pl.BlockSpec((3, 3, Cin, Cout), lambda n, h: (0, 0, 0, 0)),
        ],
        out_specs=[
            pl.BlockSpec((1, th * W, Cout), lambda n, h: (n * hg + h, 0, 0)),
            pl.BlockSpec((1, 2, Cout), lambda n, h: (n * hg + h, 0, 0)),
        ],
        out_shape=[
            jax.ShapeDtypeStruct((N * hg, th * W, Cout), jnp.bfloat16),
            jax.ShapeDtypeStruct((N * hg, 2, Cout), jnp.float32),
        ],
        compiler_params=cparams,
    )(x_pad, w4)

    # Tiny O(tiles*Cout) reduction of partial sums -> global batch statistics,
    # folded into a per-channel scale/shift (PyTorch BN: biased variance).
    count = jnp.float32(N * H * W)
    csum = jnp.sum(stats[:, 0, :], axis=0)
    csq = jnp.sum(stats[:, 1, :], axis=0)
    mean = csum / count
    var = jnp.maximum(csq / count - mean * mean, 0.0)
    inv = jax.lax.rsqrt(var + eps)
    g32 = gamma.astype(jnp.float32)
    scale = g32 * inv                                   # (Cout,)
    shift = beta.astype(jnp.float32) - mean * scale     # (Cout,)

    # Epilogue in plain JAX: XLA fuses the per-channel multiply-add into the
    # reshape + NHWC->NCHW transpose -> single HBM read/write of the activation.
    y = conv_out.reshape(N, H, W, Cout).astype(jnp.float32) * scale + shift
    return jnp.transpose(y, (0, 3, 1, 2))


def _reference(x_nchw, w_oihw, bias, gamma, beta, *, rate, eps=1e-5):
    """Pure-JAX f32 reference (lax conv + batch-stat BN) for verification."""
    y = jax.lax.conv_general_dilated(
        x_nchw, w_oihw,
        window_strides=(1, 1),
        padding=[(rate, rate), (rate, rate)],
        rhs_dilation=(rate, rate),
        dimension_numbers=("NCHW", "OIHW", "NCHW"),
    ) + bias.reshape(1, -1, 1, 1)
    mean = jnp.mean(y, axis=(0, 2, 3), keepdims=True)
    var = jnp.mean((y - mean) ** 2, axis=(0, 2, 3), keepdims=True)
    return gamma.reshape(1, -1, 1, 1) * (y - mean) * jax.lax.rsqrt(var + eps) \
        + beta.reshape(1, -1, 1, 1)


if __name__ == "__main__":
    # Small shapes consistent with the module: inplanes=4, planes=8, rate=2.
    N, Cin, H, W = 2, 4, 16, 16
    Cout = 8
    rate = 2

    key = jax.random.PRNGKey(0)
    kx, kw_, kb, kg, kbt = jax.random.split(key, 5)

    x = jax.random.normal(kx, (N, Cin, H, W), jnp.float32)
    w = jax.random.normal(kw_, (Cout, Cin, 3, 3), jnp.float32) * 0.1  # conv weight (OIHW)
    b = jax.random.normal(kb, (Cout,), jnp.float32) * 0.1             # conv bias
    gamma = 1.0 + 0.1 * jax.random.normal(kg, (Cout,), jnp.float32)   # BN weight
    beta = 0.1 * jax.random.normal(kbt, (Cout,), jnp.float32)         # BN bias

    # block_h=8 -> grid (2, 2): exercises the tiled, pipelined, parallel path.
    fwd = jax.jit(functools.partial(atrous_module_forward, rate=rate, block_h=8))
    out = fwd(x, w, b, gamma, beta)
    out = jax.block_until_ready(out)

    ref = _reference(x, w, b, gamma, beta, rate=rate)
    assert out.shape == (N, Cout, H, W)
    err = float(jnp.max(jnp.abs(out - ref)))
    # bf16 MXU inputs + bf16 conv intermediate vs. an f32 reference on a
    # unit-variance (normalized) output -> expect O(1e-2) max abs error;
    # 5e-2 leaves ~2x headroom while still catching algorithmic bugs.
    assert err < 5e-2, err

    print("KERNEL_OK")
</pallas_src>

<mosaic_0001>
module attributes {stable_mosaic.version = 11 : i64} {
  func.func @_conv_stats_kernel(%arg0: i32, %arg1: i32, %arg2: memref<1x20x20x4xbf16, #tpu.memory_space<vmem>>, %arg3: memref<3x3x4x8xbf16, #tpu.memory_space<vmem>>, %arg4: memref<1x128x8xbf16, #tpu.memory_space<vmem>>, %arg5: memref<1x2x8xf32, #tpu.memory_space<vmem>>) attributes {dimension_semantics = [#tpu.dimension_semantics<parallel>, #tpu.dimension_semantics<parallel>], iteration_bounds = array<i64: 2, 2>, scalar_prefetch = 0 : i64, scratch_operands = 0 : i64, tpu.core_type = #tpu.core_type<tc>, window_params = [{transform_indices = @transform_0, window_bounds = array<i64: 1, 20, 20, 4>}, {pipeline_mode = #tpu.pipeline_mode<synchronous>, transform_indices = @transform_1, window_bounds = array<i64: 3, 3, 4, 8>}, {transform_indices = @transform_2, window_bounds = array<i64: 1, 128, 8>}, {transform_indices = @transform_3, window_bounds = array<i64: 1, 2, 8>}]} {
    %c8_i32 = arith.constant 8 : i32
    %0 = arith.muli %arg1, %c8_i32 : i32
    %1 = tpu.assume_multiple %0, 8 : i32
    %cst = arith.constant 0.000000e+00 : f32
    %2 = vector.broadcast %cst : f32 to vector<128x8xf32>
    %c0_i32 = arith.constant 0 : i32
    %3 = arith.addi %1, %c0_i32 : i32
    %c0 = arith.constant 0 : index
    %4 = arith.index_cast %3 : i32 to index
    %c0_0 = arith.constant 0 : index
    %c0_1 = arith.constant 0 : index
    %5 = vector.load %arg2[%c0, %4, %c0_0, %c0_1] : memref<1x20x20x4xbf16, #tpu.memory_space<vmem>>, vector<1x8x16x4xbf16>
    %6 = vector.shape_cast %5 : vector<1x8x16x4xbf16> to vector<8x16x4xbf16>
    %7 = vector.shape_cast %6 : vector<8x16x4xbf16> to vector<128x4xbf16>
    %c0_2 = arith.constant 0 : index
    %c0_3 = arith.constant 0 : index
    %c0_4 = arith.constant 0 : index
    %c0_5 = arith.constant 0 : index
    %8 = vector.load %arg3[%c0_2, %c0_3, %c0_4, %c0_5] : memref<3x3x4x8xbf16, #tpu.memory_space<vmem>>, vector<1x1x4x8xbf16>
    %9 = vector.shape_cast %8 : vector<1x1x4x8xbf16> to vector<4x8xbf16>
    %cst_6 = arith.constant dense<0.000000e+00> : vector<128x8xf32>
    %10 = tpu.matmul %7, %9, %cst_6 {dimension_numbers = #tpu.dot_dimension_numbers<[1], [0], [0], [1], [0, 0, 1, 1], [], []>} : vector<128x4xbf16>, vector<4x8xbf16>, vector<128x8xf32> -> vector<128x8xf32>
    %11 = arith.addf %2, %10 : vector<128x8xf32>
    %c0_i32_7 = arith.constant 0 : i32
    %12 = arith.addi %1, %c0_i32_7 : i32
    %c0_8 = arith.constant 0 : index
    %13 = arith.index_cast %12 : i32 to index
    %c2 = arith.constant 2 : index
    %c0_9 = arith.constant 0 : index
    %14 = vector.load %arg2[%c0_8, %13, %c2, %c0_9] : memref<1x20x20x4xbf16, #tpu.memory_space<vmem>>, vector<1x8x16x4xbf16>
    %15 = vector.shape_cast %14 : vector<1x8x16x4xbf16> to vector<8x16x4xbf16>
    %16 = vector.shape_cast %15 : vector<8x16x4xbf16> to vector<128x4xbf16>
    %c0_10 = arith.constant 0 : index
    %c1 = arith.constant 1 : index
    %c0_11 = arith.constant 0 : index
    %c0_12 = arith.constant 0 : index
    %17 = vector.load %arg3[%c0_10, %c1, %c0_11, %c0_12] : memref<3x3x4x8xbf16, #tpu.memory_space<vmem>>, vector<1x1x4x8xbf16>
    %18 = vector.shape_cast %17 : vector<1x1x4x8xbf16> to vector<4x8xbf16>
    %cst_13 = arith.constant dense<0.000000e+00> : vector<128x8xf32>
    %19 = tpu.matmul %16, %18, %cst_13 {dimension_numbers = #tpu.dot_dimension_numbers<[1], [0], [0], [1], [0, 0, 1, 1], [], []>} : vector<128x4xbf16>, vector<4x8xbf16>, vector<128x8xf32> -> vector<128x8xf32>
    %20 = arith.addf %11, %19 : vector<128x8xf32>
    %c0_i32_14 = arith.constant 0 : i32
    %21 = arith.addi %1, %c0_i32_14 : i32
    %c0_15 = arith.constant 0 : index
    %22 = arith.index_cast %21 : i32 to index
    %c4 = arith.constant 4 : index
    %c0_16 = arith.constant 0 : index
    %23 = vector.load %arg2[%c0_15, %22, %c4, %c0_16] : memref<1x20x20x4xbf16, #tpu.memory_space<vmem>>, vector<1x8x16x4xbf16>
    %24 = vector.shape_cast %23 : vector<1x8x16x4xbf16> to vector<8x16x4xbf16>
    %25 = vector.shape_cast %24 : vector<8x16x4xbf16> to vector<128x4xbf16>
    %c0_17 = arith.constant 0 : index
    %c2_18 = arith.constant 2 : index
    %c0_19 = arith.constant 0 : index
    %c0_20 = arith.constant 0 : index
    %26 = vector.load %arg3[%c0_17, %c2_18, %c0_19, %c0_20] : memref<3x3x4x8xbf16, #tpu.memory_space<vmem>>, vector<1x1x4x8xbf16>
    %27 = vector.shape_cast %26 : vector<1x1x4x8xbf16> to vector<4x8xbf16>
    %cst_21 = arith.constant dense<0.000000e+00> : vector<128x8xf32>
    %28 = tpu.matmul %25, %27, %cst_21 {dimension_numbers = #tpu.dot_dimension_numbers<[1], [0], [0], [1], [0, 0, 1, 1], [], []>} : vector<128x4xbf16>, vector<4x8xbf16>, vector<128x8xf32> -> vector<128x8xf32>
    %29 = arith.addf %20, %28 : vector<128x8xf32>
    %c2_i32 = arith.constant 2 : i32
    %30 = arith.addi %1, %c2_i32 : i32
    %c0_22 = arith.constant 0 : index
    %31 = arith.index_cast %30 : i32 to index
    %c0_23 = arith.constant 0 : index
    %c0_24 = arith.constant 0 : index
    %32 = vector.load %arg2[%c0_22, %31, %c0_23, %c0_24] : memref<1x20x20x4xbf16, #tpu.memory_space<vmem>>, vector<1x8x16x4xbf16>
    %33 = vector.shape_cast %32 : vector<1x8x16x4xbf16> to vector<8x16x4xbf16>
    %34 = vector.shape_cast %33 : vector<8x16x4xbf16> to vector<128x4xbf16>
    %c1_25 = arith.constant 1 : index
    %c0_26 = arith.constant 0 : index
    %c0_27 = arith.constant 0 : index
    %c0_28 = arith.constant 0 : index
    %35 = vector.load %arg3[%c1_25, %c0_26, %c0_27, %c0_28] : memref<3x3x4x8xbf16, #tpu.memory_space<vmem>>, vector<1x1x4x8xbf16>
    %36 = vector.shape_cast %35 : vector<1x1x4x8xbf16> to vector<4x8xbf16>
    %cst_29 = arith.constant dense<0.000000e+00> : vector<128x8xf32>
    %37 = tpu.matmul %34, %36, %cst_29 {dimension_numbers = #tpu.dot_dimension_numbers<[1], [0], [0], [1], [0, 0, 1, 1], [], []>} : vector<128x4xbf16>, vector<4x8xbf16>, vector<128x8xf32> -> vector<128x8xf32>
    %38 = arith.addf %29, %37 : vector<128x8xf32>
    %c2_i32_30 = arith.constant 2 : i32
    %39 = arith.addi %1, %c2_i32_30 : i32
    %c0_31 = arith.constant 0 : index
    %40 = arith.index_cast %39 : i32 to index
    %c2_32 = arith.constant 2 : index
    %c0_33 = arith.constant 0 : index
    %41 = vector.load %arg2[%c0_31, %40, %c2_32, %c0_33] : memref<1x20x20x4xbf16, #tpu.memory_space<vmem>>, vector<1x8x16x4xbf16>
    %42 = vector.shape_cast %41 : vector<1x8x16x4xbf16> to vector<8x16x4xbf16>
    %43 = vector.shape_cast %42 : vector<8x16x4xbf16> to vector<128x4xbf16>
    %c1_34 = arith.constant 1 : index
    %c1_35 = arith.constant 1 : index
    %c0_36 = arith.constant 0 : index
    %c0_37 = arith.constant 0 : index
    %44 = vector.load %arg3[%c1_34, %c1_35, %c0_36, %c0_37] : memref<3x3x4x8xbf16, #tpu.memory_space<vmem>>, vector<1x1x4x8xbf16>
    %45 = vector.shape_cast %44 : vector<1x1x4x8xbf16> to vector<4x8xbf16>
    %cst_38 = arith.constant dense<0.000000e+00> : vector<128x8xf32>
    %46 = tpu.matmul %43, %45, %cst_38 {dimension_numbers = #tpu.dot_dimension_numbers<[1], [0], [0], [1], [0, 0, 1, 1], [], []>} : vector<128x4xbf16>, vector<4x8xbf16>, vector<128x8xf32> -> vector<128x8xf32>
    %47 = arith.addf %38, %46 : vector<128x8xf32>
    %c2_i32_39 = arith.constant 2 : i32
    %48 = arith.addi %1, %c2_i32_39 : i32
    %c0_40 = arith.constant 0 : index
    %49 = arith.index_cast %48 : i32 to index
    %c4_41 = arith.constant 4 : index
    %c0_42 = arith.constant 0 : index
    %50 = vector.load %arg2[%c0_40, %49, %c4_41, %c0_42] : memref<1x20x20x4xbf16, #tpu.memory_space<vmem>>, vector<1x8x16x4xbf16>
    %51 = vector.shape_cast %50 : vector<1x8x16x4xbf16> to vector<8x16x4xbf16>
    %52 = vector.shape_cast %51 : vector<8x16x4xbf16> to vector<128x4xbf16>
    %c1_43 = arith.constant 1 : index
    %c2_44 = arith.constant 2 : index
    %c0_45 = arith.constant 0 : index
    %c0_46 = arith.constant 0 : index
    %53 = vector.load %arg3[%c1_43, %c2_44, %c0_45, %c0_46] : memref<3x3x4x8xbf16, #tpu.memory_space<vmem>>, vector<1x1x4x8xbf16>
    %54 = vector.shape_cast %53 : vector<1x1x4x8xbf16> to vector<4x8xbf16>
    %cst_47 = arith.constant dense<0.000000e+00> : vector<128x8xf32>
    %55 = tpu.matmul %52, %54, %cst_47 {dimension_numbers = #tpu.dot_dimension_numbers<[1], [0], [0], [1], [0, 0, 1, 1], [], []>} : vector<128x4xbf16>, vector<4x8xbf16>, vector<128x8xf32> -> vector<128x8xf32>
    %56 = arith.addf %47, %55 : vector<128x8xf32>
    %c4_i32 = arith.constant 4 : i32
    %57 = arith.addi %1, %c4_i32 : i32
    %c0_48 = arith.constant 0 : index
    %58 = arith.index_cast %57 : i32 to index
    %c0_49 = arith.constant 0 : index
    %c0_50 = arith.constant 0 : index
    %59 = vector.load %arg2[%c0_48, %58, %c0_49, %c0_50] : memref<1x20x20x4xbf16, #tpu.memory_space<vmem>>, vector<1x8x16x4xbf16>
    %60 = vector.shape_cast %59 : vector<1x8x16x4xbf16> to vector<8x16x4xbf16>
    %61 = vector.shape_cast %60 : vector<8x16x4xbf16> to vector<128x4xbf16>
    %c2_51 = arith.constant 2 : index
    %c0_52 = arith.constant 0 : index
    %c0_53 = arith.constant 0 : index
    %c0_54 = arith.constant 0 : index
    %62 = vector.load %arg3[%c2_51, %c0_52, %c0_53, %c0_54] : memref<3x3x4x8xbf16, #tpu.memory_space<vmem>>, vector<1x1x4x8xbf16>
    %63 = vector.shape_cast %62 : vector<1x1x4x8xbf16> to vector<4x8xbf16>
    %cst_55 = arith.constant dense<0.000000e+00> : vector<128x8xf32>
    %64 = tpu.matmul %61, %63, %cst_55 {dimension_numbers = #tpu.dot_dimension_numbers<[1], [0], [0], [1], [0, 0, 1, 1], [], []>} : vector<128x4xbf16>, vector<4x8xbf16>, vector<128x8xf32> -> vector<128x8xf32>
    %65 = arith.addf %56, %64 : vector<128x8xf32>
    %c4_i32_56 = arith.constant 4 : i32
    %66 = arith.addi %1, %c4_i32_56 : i32
    %c0_57 = arith.constant 0 : index
    %67 = arith.index_cast %66 : i32 to index
    %c2_58 = arith.constant 2 : index
    %c0_59 = arith.constant 0 : index
    %68 = vector.load %arg2[%c0_57, %67, %c2_58, %c0_59] : memref<1x20x20x4xbf16, #tpu.memory_space<vmem>>, vector<1x8x16x4xbf16>
    %69 = vector.shape_cast %68 : vector<1x8x16x4xbf16> to vector<8x16x4xbf16>
    %70 = vector.shape_cast %69 : vector<8x16x4xbf16> to vector<128x4xbf16>
    %c2_60 = arith.constant 2 : index
    %c1_61 = arith.constant 1 : index
    %c0_62 = arith.constant 0 : index
    %c0_63 = arith.constant 0 : index
    %71 = vector.load %arg3[%c2_60, %c1_61, %c0_62, %c0_63] : memref<3x3x4x8xbf16, #tpu.memory_space<vmem>>, vector<1x1x4x8xbf16>
    %72 = vector.shape_cast %71 : vector<1x1x4x8xbf16> to vector<4x8xbf16>
    %cst_64 = arith.constant dense<0.000000e+00> : vector<128x8xf32>
    %73 = tpu.matmul %70, %72, %cst_64 {dimension_numbers = #tpu.dot_dimension_numbers<[1], [0], [0], [1], [0, 0, 1, 1], [], []>} : vector<128x4xbf16>, vector<4x8xbf16>, vector<128x8xf32> -> vector<128x8xf32>
    %74 = arith.addf %65, %73 : vector<128x8xf32>
    %c4_i32_65 = arith.constant 4 : i32
    %75 = arith.addi %1, %c4_i32_65 : i32
    %c0_66 = arith.constant 0 : index
    %76 = arith.index_cast %75 : i32 to index
    %c4_67 = arith.constant 4 : index
    %c0_68 = arith.constant 0 : index
    %77 = vector.load %arg2[%c0_66, %76, %c4_67, %c0_68] : memref<1x20x20x4xbf16, #tpu.memory_space<vmem>>, vector<1x8x16x4xbf16>
    %78 = vector.shape_cast %77 : vector<1x8x16x4xbf16> to vector<8x16x4xbf16>
    %79 = vector.shape_cast %78 : vector<8x16x4xbf16> to vector<128x4xbf16>
    %c2_69 = arith.constant 2 : index
    %c2_70 = arith.constant 2 : index
    %c0_71 = arith.constant 0 : index
    %c0_72 = arith.constant 0 : index
    %80 = vector.load %arg3[%c2_69, %c2_70, %c0_71, %c0_72] : memref<3x3x4x8xbf16, #tpu.memory_space<vmem>>, vector<1x1x4x8xbf16>
    %81 = vector.shape_cast %80 : vector<1x1x4x8xbf16> to vector<4x8xbf16>
    %cst_73 = arith.constant dense<0.000000e+00> : vector<128x8xf32>
    %82 = tpu.matmul %79, %81, %cst_73 {dimension_numbers = #tpu.dot_dimension_numbers<[1], [0], [0], [1], [0, 0, 1, 1], [], []>} : vector<128x4xbf16>, vector<4x8xbf16>, vector<128x8xf32> -> vector<128x8xf32>
    %83 = arith.addf %74, %82 : vector<128x8xf32>
    %84 = arith.truncf %83 : vector<128x8xf32> to vector<128x8xbf16>
    %c0_74 = arith.constant 0 : index
    %c0_75 = arith.constant 0 : index
    %c0_76 = arith.constant 0 : index
    %85 = vector.load %arg4[%c0_74, %c0_75, %c0_76] : memref<1x128x8xbf16, #tpu.memory_space<vmem>>, vector<1x128x8xbf16>
    %86 = vector.shape_cast %85 : vector<1x128x8xbf16> to vector<128x8xbf16>
    %87 = vector.shape_cast %84 : vector<128x8xbf16> to vector<1x128x8xbf16>
    tpu.vector_store %arg4[%c0_74, %c0_75, %c0_76], %87 {strides = array<i32>} : memref<1x128x8xbf16, #tpu.memory_space<vmem>>, vector<1x128x8xbf16>,
    %cst_77 = arith.constant dense<0.000000e+00> : vector<8xf32>
    %88 = vector.multi_reduction <add>, %83, %cst_77 [0] : vector<128x8xf32> to vector<8xf32>
    %89 = vector.shape_cast %88 : vector<8xf32> to vector<1x8xf32>
    %c0_78 = arith.constant 0 : index
    %c0_79 = arith.constant 0 : index
    %c0_80 = arith.constant 0 : index
    %90 = vector.load %arg5[%c0_78, %c0_79, %c0_80] : memref<1x2x8xf32, #tpu.memory_space<vmem>>, vector<1x1x8xf32>
    %91 = vector.shape_cast %90 : vector<1x1x8xf32> to vector<1x8xf32>
    %92 = vector.shape_cast %89 : vector<1x8xf32> to vector<1x1x8xf32>
    tpu.vector_store %arg5[%c0_78, %c0_79, %c0_80], %92 {strides = array<i32>} : memref<1x2x8xf32, #tpu.memory_space<vmem>>, vector<1x1x8xf32>,
    %93 = arith.mulf %83, %83 : vector<128x8xf32>
    %cst_81 = arith.constant dense<0.000000e+00> : vector<8xf32>
    %94 = vector.multi_reduction <add>, %93, %cst_81 [0] : vector<128x8xf32> to vector<8xf32>
    %95 = vector.shape_cast %94 : vector<8xf32> to vector<1x8xf32>
    %c0_82 = arith.constant 0 : index
    %c1_83 = arith.constant 1 : index
    %c0_84 = arith.constant 0 : index
    %96 = vector.load %arg5[%c0_82, %c1_83, %c0_84] : memref<1x2x8xf32, #tpu.memory_space<vmem>>, vector<1x1x8xf32>
    %97 = vector.shape_cast %96 : vector<1x1x8xf32> to vector<1x8xf32>
    %98 = vector.shape_cast %95 : vector<1x8xf32> to vector<1x1x8xf32>
    tpu.vector_store %arg5[%c0_82, %c1_83, %c0_84], %98 {strides = array<i32>} : memref<1x2x8xf32, #tpu.memory_space<vmem>>, vector<1x1x8xf32>,
    return
  }
  func.func @transform_0(%arg0: i32, %arg1: i32) -> (i32, i32, i32, i32) {
    %c0_i32 = arith.constant 0 : i32
    %c0_i32_0 = arith.constant 0 : i32
    %c0_i32_1 = arith.constant 0 : i32
    %c0_i32_2 = arith.constant 0 : i32
    return %arg0, %c0_i32, %c0_i32_0, %c0_i32_1 : i32, i32, i32, i32
  }
  func.func @transform_1(%arg0: i32, %arg1: i32) -> (i32, i32, i32, i32) {
    %c0_i32 = arith.constant 0 : i32
    %c0_i32_0 = arith.constant 0 : i32
    %c0_i32_1 = arith.constant 0 : i32
    %c0_i32_2 = arith.constant 0 : i32
    %c0_i32_3 = arith.constant 0 : i32
    return %c0_i32, %c0_i32_0, %c0_i32_1, %c0_i32_2 : i32, i32, i32, i32
  }
  func.func @transform_2(%arg0: i32, %arg1: i32) -> (i32, i32, i32) {
    %c2_i32 = arith.constant 2 : i32
    %0 = arith.muli %arg0, %c2_i32 : i32
    %1 = arith.addi %0, %arg1 : i32
    %c0_i32 = arith.constant 0 : i32
    %c0_i32_0 = arith.constant 0 : i32
    %c0_i32_1 = arith.constant 0 : i32
    return %1, %c0_i32, %c0_i32_0 : i32, i32, i32
  }
  func.func @transform_3(%arg0: i32, %arg1: i32) -> (i32, i32, i32) {
    %c2_i32 = arith.constant 2 : i32
    %0 = arith.muli %arg0, %c2_i32 : i32
    %1 = arith.addi %0, %arg1 : i32
    %c0_i32 = arith.constant 0 : i32
    %c0_i32_0 = arith.constant 0 : i32
    %c0_i32_1 = arith.constant 0 : i32
    return %1, %c0_i32, %c0_i32_0 : i32, i32, i32
  }
}

</mosaic_0001>

<llo_original>
// kernel: atrous_module_forward.1
$region0: #{atrous_module_forward.1}
  #allocation0 [shape = 'u32[]', space=smem, size = 0x4, offset = 0x4, fixed_abs, tag = 'smem constant byte address 0x4 - core index']
  #allocation1 [shape = 'u32[144,128]{1,0:T(1,128)}', space=vmem, size = 0x12000, scoped, tag = 'internal scratch']
  %s0 = inlined_call_operand.vmem [shape: bf16[2,20,20,4], index: 0, kind: input, shape index: {}]
  %s1 = inlined_call_operand.vmem [shape: bf16[3,3,4,8], index: 1, kind: input, shape index: {}]
  %s2 = inlined_call_operand.vmem [shape: bf16[4,128,8], index: 2, kind: output, shape index: {0}]
  %s3 = inlined_call_operand.vmem [shape: f32[4,2,8], index: 3, kind: output, shape index: {1}]
  %4 = xla_tuple %s2, %s3
  %s5 = sld [smem:[#allocation0]]
  $region49: #{atrous_module_forward.1} parent=0
    _
  %s7 = ssub.s32 1, %s5
  %s8 = scalar_select 0, %s7, %s5
  loop: start=0, step=1, limit=6
  $region2: #{atrous_module_forward.1} parent=0 // loop_pre_header
    _
  $region3: #{atrous_module_forward.1} parent=0 // loop_header
    %s10 = sphi 0, %s14
    %p11 = scmp.ge.s32.totalorder %s10, 6
    %s17 = sphi 0, %s29
    %s18 = sphi 0, %s25
    %s19 = sphi 0, %s17
    %s20 = sphi 0, %s18
    %s21 = sphi 0, %s19
    %s22 = sphi 0, %s20
    %s32 = sphi 0, %s34
    %s35 = sphi 0, %s32
    %s36 = sphi 0, %s35
    %s52 = sphi 0, %s36
    %s56 = sphi 0, %s56
    %s58 = sphi 0, %s56
    %s59 = sphi 0, %s58
    %s73 = sphi 0, %s59
    %s83 = sphi 0, %s85
    %s86 = sphi 0, %s83
    %s87 = sphi 0, %s86
    %s103 = sphi 0, %s87
    %s113 = sphi 0, %s115
    %s116 = sphi 0, %s113
    %s117 = sphi 0, %s116
    %s133 = sphi 0, %s117
  $region4: #{atrous_module_forward.1} parent=0 // loop_header_branch
    %13 = sbr.rel (%p11) target = $region8
  $region5: #{atrous_module_forward.1} parent=0 // loop_body
    %s15 = ssub.s32 %s10, 1
    %s16 = ssub.s32 %s10, 2
    %s23 = sadd.s32 1, %s18
    %p24 = scmp.ge.s32.totalorder %s23, 2
    %s25 = scalar_select %p24, 0, %s23
    %s26 = sadd.s32 1, %s17
    %s27 = scalar_select %p24, %s26, %s17
    %p28 = scmp.ge.s32.totalorder %s27, 2
    %s29 = scalar_select %p28, 0, %s27
    %s30 = ssub.s32 %s17, %s29
    %p31 = scmp.eq.s32.totalorder %s30, 0
    %s33 = sadd.s32 %s32, 1
    %s34 = scalar_select %p31, %s32, %s33
    %p37 = pneg %p31
    %p38 = scmp.eq.s32.totalorder %s10, 3
    %p39 = por %p37, %p38
    %p40 = scmp.ne.s32.totalorder %s32, %s35
    %p41 = scmp.eq.s32.totalorder %s10, 0
    %p42 = por %p40, %p41
    %p43 = scmp.ne.s32.totalorder %s32, %s35
    %p44 = scmp.eq.s32.totalorder %s15, 3
    %p45 = por %p43, %p44
    %p46 = scmp.ne.s32.totalorder %s35, %s36
    %p47 = scmp.eq.s32.totalorder %s15, 0
    %p48 = por %p46, %p47
    %p49 = scmp.ne.s32.totalorder %s35, %s36
    %p50 = scmp.eq.s32.totalorder %s16, 3
    %p51 = por %p49, %p50
    %p53 = scmp.ne.s32.totalorder %s36, %s52
    %p54 = scmp.eq.s32.totalorder %s16, 0
    %p55 = por %p53, %p54
    %s57 = sadd.s32 %s56, 1
    %p60 = scmp.eq.s32.totalorder %s10, 3
    %p61 = scmp.ne.s32.totalorder %s56, %s58
    %p62 = scmp.eq.s32.totalorder %s10, 0
    %p63 = por %p61, %p62
    %p64 = scmp.ne.s32.totalorder %s56, %s58
    %p65 = scmp.eq.s32.totalorder %s15, 3
    %p66 = por %p64, %p65
    %p67 = scmp.ne.s32.totalorder %s58, %s59
    %p68 = scmp.eq.s32.totalorder %s15, 0
    %p69 = por %p67, %p68
    %p70 = scmp.ne.s32.totalorder %s58, %s59
    %p71 = scmp.eq.s32.totalorder %s16, 3
    %p72 = por %p70, %p71
    %p74 = scmp.ne.s32.totalorder %s59, %s73
    %p75 = scmp.eq.s32.totalorder %s16, 0
    %p76 = por %p74, %p75
    %s77 = smul.u32 %s17, 2
    %s78 = sadd.s32 %s77, %s18
    %s79 = smul.u32 %s29, 2
    %s80 = sadd.s32 %s79, %s25
    %s81 = ssub.s32 %s78, %s80
    %p82 = scmp.eq.s32.totalorder %s81, 0
    %s84 = sadd.s32 %s83, 1
    %s85 = scalar_select %p82, %s83, %s84
    %p88 = pneg %p82
    %p89 = scmp.eq.s32.totalorder %s10, 3
    %p90 = por %p88, %p89
    %p91 = scmp.ne.s32.totalorder %s83, %s86
    %p92 = scmp.eq.s32.totalorder %s10, 0
    %p93 = por %p91, %p92
    %p94 = scmp.ne.s32.totalorder %s83, %s86
    %p95 = scmp.eq.s32.totalorder %s15, 3
    %p96 = por %p94, %p95
    %p97 = scmp.ne.s32.totalorder %s86, %s87
    %p98 = scmp.eq.s32.totalorder %s15, 0
    %p99 = por %p97, %p98
    %p100 = scmp.ne.s32.totalorder %s86, %s87
    %p101 = scmp.eq.s32.totalorder %s16, 3
    %p102 = por %p100, %p101
    %p104 = scmp.ne.s32.totalorder %s87, %s103
    %p105 = scmp.eq.s32.totalorder %s16, 0
    %p106 = por %p104, %p105
    %s107 = smul.u32 %s17, 2
    %s108 = sadd.s32 %s107, %s18
    %s109 = smul.u32 %s29, 2
    %s110 = sadd.s32 %s109, %s25
    %s111 = ssub.s32 %s108, %s110
    %p112 = scmp.eq.s32.totalorder %s111, 0
    %s114 = sadd.s32 %s113, 1
    %s115 = scalar_select %p112, %s113, %s114
    %p118 = pneg %p112
    %p119 = scmp.eq.s32.totalorder %s10, 3
    %p120 = por %p118, %p119
    %p121 = scmp.ne.s32.totalorder %s113, %s116
    %p122 = scmp.eq.s32.totalorder %s10, 0
    %p123 = por %p121, %p122
    %p124 = scmp.ne.s32.totalorder %s113, %s116
    %p125 = scmp.eq.s32.totalorder %s15, 3
    %p126 = por %p124, %p125
    %p127 = scmp.ne.s32.totalorder %s116, %s117
    %p128 = scmp.eq.s32.totalorder %s15, 0
    %p129 = por %p127, %p128
    %p130 = scmp.ne.s32.totalorder %s116, %s117
    %p131 = scmp.eq.s32.totalorder %s16, 3
    %p132 = por %p130, %p131
    %p134 = scmp.ne.s32.totalorder %s117, %s133
    %p135 = scmp.eq.s32.totalorder %s16, 0
    %p136 = por %p134, %p135
    %p137 = scmp.le.s32.totalorder 1, %s10
    %p138 = scmp.lt.s32.totalorder %s10, 5
    %p139 = pnand %p137, %p138
    %p140 = pneg %p139
    // Predicated region
    $region9: #{atrous_module_forward.1} parent=5 // pred_check
      _
    $region10: #{atrous_module_forward.1} parent=5 // pred_check_branch
      %142 = sbr.rel (%p139) target = $region12
    $region11: #{atrous_module_forward.1} parent=5 // pred_region
      %s143 = ssub.s32 %s10, 1
      // Predicated region
      $region13: #{atrous_module_forward.1} parent=11 // pred_check
        %p144 = pneg %p69
      $region14: #{atrous_module_forward.1} parent=11 // pred_check_branch
        %146 = sbr.rel (%p144) target = $region16
      $region15: #{atrous_module_forward.1} parent=11 // pred_region
        _
      $region16: #{atrous_module_forward.1} parent=11 // pred_fallthru
        _
    $region12: #{atrous_module_forward.1} parent=5 // pred_fallthru
      _
    %p147 = scmp.lt.s32.totalorder %s10, 4
    // Predicated region
    $region17: #{atrous_module_forward.1} parent=5 // pred_check
      %p148 = pneg %p147
    $region18: #{atrous_module_forward.1} parent=5 // pred_check_branch
      %150 = sbr.rel (%p148) target = $region20
    $region19: #{atrous_module_forward.1} parent=5 // pred_region
      // Predicated region
      $region21: #{atrous_module_forward.1} parent=19 // pred_check
        %p151 = pneg %p42
      $region22: #{atrous_module_forward.1} parent=19 // pred_check_branch
        %153 = sbr.rel (%p151) target = $region24
      $region23: #{atrous_module_forward.1} parent=19 // pred_region
        %p154 = scmp.lt.s32.totalorder %s17, 1
        %s155 = scalar_select %p154, %s17, 1
        %s156 = smul.addr %s155, 60
        %s157 = smul.addr %s156, 4
        %s158 = scalar_lea.vmem %s0, %s157
      $region24: #{atrous_module_forward.1} parent=19 // pred_fallthru
        _
    $region20: #{atrous_module_forward.1} parent=5 // pred_fallthru
      _
    %p159 = scmp.le.s32.totalorder 1, %s10
    %p160 = scmp.lt.s32.totalorder %s10, 5
    %p161 = pnand %p159, %p160
    %p162 = pneg %p161
    // Predicated region
    $region25: #{atrous_module_forward.1} parent=5 // pred_check
      _
    $region26: #{atrous_module_forward.1} parent=5 // pred_check_branch
      %164 = sbr.rel (%p161) target = $region28
    $region27: #{atrous_module_forward.1} parent=5 // pred_region
      %s165 = ssub.s32 %s10, 1
      %p166 = scmp.lt.s32.totalorder %s19, 1
      %s167 = scalar_select %p166, %s19, 1
      %s168 = smul.addr %s167, 60
      %s169 = smul.addr %s168, 4
      %s170 = scalar_lea.vmem %s0, %s169
      %p171 = pneg %p48
      %p172 = pneg %p45
      %p173 = pneg %p69
      %p174 = pneg %p66
      %p175 = pneg %p99
      %p176 = pneg %p96
      %s177 = smul.u32 %s19, 2
      %s178 = sadd.s32 %s177, %s20
      %p179 = scmp.lt.s32.totalorder %s178, 3
      %s180 = scalar_select %p179, %s178, 3
      %s181 = smul.addr %s180, 16
      %s182 = smul.addr %s181, 4
      %s183 = scalar_lea.vmem %s2, %s182
      %p184 = pneg %p129
      %p185 = pneg %p126
      %s186 = smul.u32 %s19, 2
      %s187 = sadd.s32 %s186, %s20
      %p188 = scmp.lt.s32.totalorder %s187, 3
      %s189 = scalar_select %p188, %s187, 3
      %s190 = smul.addr %s189, 2
      %s191 = scalar_lea.vmem %s3, %s190
      %p192 = scmp.lt.s32.totalorder %s19, 1
      %s193 = scalar_select %p192, %s19, 1
      %s194 = smul.addr %s193, 60
      %s195 = smul.addr %s194, 4
      %s196 = scalar_lea.vmem %s0, %s195
      %s197 = smul.u32 %s19, 2
      %s198 = sadd.s32 %s197, %s20
      %p199 = scmp.lt.s32.totalorder %s198, 3
      %s200 = scalar_select %p199, %s198, 3
      %s201 = smul.addr %s200, 16
      %s202 = smul.addr %s201, 4
      %s203 = scalar_lea.vmem %s2, %s202
      %s204 = smul.u32 %s19, 2
      %s205 = sadd.s32 %s204, %s20
      %s206 = smul.u32 %s19, 2
      %s207 = sadd.s32 %s206, %s20
      %p208 = scmp.lt.s32.totalorder %s207, 3
      %s209 = scalar_select %p208, %s207, 3
      %s210 = smul.addr %s209, 2
      %s211 = scalar_lea.vmem %s3, %s210
      %s212 = smul.u32 %s19, 2
      %s213 = sadd.s32 %s212, %s20
      %s215 = smul.u32 %s20, 8
      %s216 = smul.u32 %s215, 3
      %s217 = smul.addr %s216, 4
      %s218 = scalar_lea.vmem %s196, %s217
      %v219 = vld [vmem:[%s218] sm:$0xf]
      %v220 = vld [vmem:[%s218 + $0x4] sm:$0xf]
      %v221 = vld [vmem:[%s218 + $0xc] sm:$0xf]
      %v222 = vld [vmem:[%s218 + $0x10] sm:$0xf]
      %v223 = vld [vmem:[%s218 + $0x18] sm:$0xf]
      %v224 = vld [vmem:[%s218 + $0x1c] sm:$0xf]
      %v225 = vld [vmem:[%s218 + $0x24] sm:$0xf]
      %v226 = vld [vmem:[%s218 + $0x28] sm:$0xf]
      %v227 = vld [vmem:[%s218 + $0x30] sm:$0xf]
      %v228 = vld [vmem:[%s218 + $0x34] sm:$0xf]
      %v229 = vld [vmem:[%s218 + $0x3c] sm:$0xf]
      %v230 = vld [vmem:[%s218 + $0x40] sm:$0xf]
      %v231 = vld [vmem:[%s218 + $0x48] sm:$0xf]
      %v232 = vld [vmem:[%s218 + $0x4c] sm:$0xf]
      %v233 = vld [vmem:[%s218 + $0x54] sm:$0xf]
      %v234 = vld [vmem:[%s218 + $0x58] sm:$0xf]
      %v235 = vld [vmem:[%s1] sm:$0x3]
      %v236 = vld [vmem:[%s218] sm:$0xe]
      %v237 = vld [vmem:[%s218 + $0x8] sm:$0x1]
      %v238 = vld [vmem:[%s218 + $0xc] sm:$0xe]
      %v239 = vld [vmem:[%s218 + $0x14] sm:$0x1]
      %v240 = vld [vmem:[%s218 + $0x18] sm:$0xe]
      %v241 = vld [vmem:[%s218 + $0x20] sm:$0x1]
      %v242 = vld [vmem:[%s218 + $0x24] sm:$0xe]
      %v243 = vld [vmem:[%s218 + $0x2c] sm:$0x1]
      %v244 = vld [vmem:[%s218 + $0x30] sm:$0xe]
      %v245 = vld [vmem:[%s218 + $0x38] sm:$0x1]
      %v246 = vld [vmem:[%s218 + $0x3c] sm:$0xe]
      %v247 = vld [vmem:[%s218 + $0x44] sm:$0x1]
      %v248 = vld [vmem:[%s218 + $0x48] sm:$0xe]
      %v249 = vld [vmem:[%s218 + $0x50] sm:$0x1]
      %v250 = vld [vmem:[%s218 + $0x54] sm:$0xe]
      %v251 = vld [vmem:[%s218 + $0x5c] sm:$0x1]
      %vm276 = vcmask 1042432
      %vm277 = vcmask 1046532
      %vm278 = vmor %vm276, %vm277
      %v279 = vrot.slane %v236, 5
      %v280 = vrot.slane %v279, 4
      %v281 = vrot.slane %v220, 5
      %v282 = vsel %vm278, %v280, %v281
      %v283 = vrot.slane %v281, 4
      %v284 = vrot.slane %v237, 5
      %v285 = vsel %vm278, %v283, %v284
      %v286 = vrot.slane %v238, 5
      %v287 = vrot.slane %v286, 4
      %v288 = vrot.slane %v222, 5
      %v289 = vsel %vm278, %v287, %v288
      %v290 = vrot.slane %v288, 4
      %v291 = vrot.slane %v239, 5
      %v292 = vsel %vm278, %v290, %v291
      %v293 = vrot.slane %v240, 5
      %v294 = vrot.slane %v293, 4
      %v295 = vrot.slane %v224, 5
      %v296 = vsel %vm278, %v294, %v295
      %v297 = vrot.slane %v295, 4
      %v298 = vrot.slane %v241, 5
      %v299 = vsel %vm278, %v297, %v298
      %v300 = vrot.slane %v242, 5
      %v301 = vrot.slane %v300, 4
      %v302 = vrot.slane %v226, 5
      %v303 = vsel %vm278, %v301, %v302
      %v304 = vrot.slane %v302, 4
      %v305 = vrot.slane %v243, 5
      %v306 = vsel %vm278, %v304, %v305
      %v307 = vrot.slane %v244, 5
      %v308 = vrot.slane %v307, 4
      %v309 = vrot.slane %v228, 5
      %v310 = vsel %vm278, %v308, %v309
      %v311 = vrot.slane %v309, 4
      %v312 = vrot.slane %v245, 5
      %v313 = vsel %vm278, %v311, %v312
      %v314 = vrot.slane %v246, 5
      %v315 = vrot.slane %v314, 4
      %v316 = vrot.slane %v230, 5
      %v317 = vsel %vm278, %v315, %v316
      %v318 = vrot.slane %v316, 4
      %v319 = vrot.slane %v247, 5
      %v320 = vsel %vm278, %v318, %v319
      %v321 = vrot.slane %v248, 5
      %v322 = vrot.slane %v321, 4
      %v323 = vrot.slane %v232, 5
      %v324 = vsel %vm278, %v322, %v323
      %v325 = vrot.slane %v323, 4
      %v326 = vrot.slane %v249, 5
      %v327 = vsel %vm278, %v325, %v326
      %v328 = vrot.slane %v250, 5
      %v329 = vrot.slane %v328, 4
      %v330 = vrot.slane %v234, 5
      %v331 = vsel %vm278, %v329, %v330
      %v332 = vrot.slane %v330, 4
      %v333 = vrot.slane %v251, 5
      %v334 = vsel %vm278, %v332, %v333
      %s335 = scalar_lea.vmem %s1, 2
      %v336 = vld [vmem:[%s335] sm:$0x3]
      %v337 = vunpack.c.l.b16 %v282
      %v338 = vunpack.c.l.b16 %v285
      %v339 = vunpack.c.l.b16 %v289
      %v340 = vunpack.c.l.b16 %v292
      %v341 = vunpack.c.l.b16 %v296
      %v342 = vunpack.c.l.b16 %v299
      %v343 = vunpack.c.l.b16 %v303
      %v344 = vunpack.c.l.b16 %v306
      %v345 = vunpack.c.l.b16 %v310
      %v346 = vunpack.c.l.b16 %v313
      %v347 = vunpack.c.l.b16 %v317
      %v348 = vunpack.c.l.b16 %v320
      %v349 = vunpack.c.l.b16 %v324
      %v350 = vunpack.c.l.b16 %v327
      %v351 = vunpack.c.l.b16 %v331
      %v352 = vunpack.c.l.b16 %v334
      %v353 = vpack.c.b16 %v338, %v337
      %v354 = vpack.c.b16 %v340, %v339
      %v355 = vpack.c.b16 %v342, %v341
      %v356 = vpack.c.b16 %v344, %v343
      %v357 = vpack.c.b16 %v346, %v345
      %v358 = vpack.c.b16 %v348, %v347
      %v359 = vpack.c.b16 %v350, %v349
      %v360 = vpack.c.b16 %v352, %v351
      %vm361 = vcmask 31744
      %v363 = vsel %vm361, %v353, 0
      %v366 = vsel %vm361, %v354, 0
      %v369 = vsel %vm361, %v355, 0
      %v372 = vsel %vm361, %v356, 0
      %v375 = vsel %vm361, %v357, 0
      %v378 = vsel %vm361, %v358, 0
      %v381 = vsel %vm361, %v359, 0
      %v384 = vsel %vm361, %v360, 0
      %vm386 = vcmask 1041408
      %v388 = vsel %vm386, %v336, 0
      %390 = vmatprep.subr.bf16.mxu0 0
      %391 = vmatpush1.bf16.msra.mxu0 0
      %392 = vmatprep.subr.bf16.mxu0 0
      %393 = vmatpush1.bf16.msra.mxu0 0
      %394 = vmatprep.subr.bf16.mxu0 0
      %395 = vmatpush1.bf16.msra.mxu0 0
      %396 = vmatprep.subr.bf16.mxu0 0
      %397 = vmatpush1.bf16.msra.mxu0 0
      %398 = vmatprep.subr.bf16.mxu0 0
      %399 = vmatpush1.bf16.msra.mxu0 0
      %400 = vmatprep.subr.bf16.mxu0 0
      %401 = vmatpush1.bf16.msra.mxu0 0
      %402 = vmatprep.subr.bf16.mxu0 0
      %403 = vmatpush1.bf16.msra.mxu0 0
      %404 = vmatprep.subr.bf16.mxu0 0
      %405 = vmatpush1.bf16.msra.mxu0 %v388
      %406 = vmatprep.subr.bf16.mxu0 0
      %407 = vmatpush2.bf16.msra.mxu0 0
      %408 = vmatprep.subr.bf16.mxu0 0
      %409 = vmatpush2.bf16.msra.mxu0 0
      %410 = vmatprep.subr.bf16.mxu0 0
      %411 = vmatpush2.bf16.msra.mxu0 0
      %412 = vmatprep.subr.bf16.mxu0 0
      %413 = vmatpush2.bf16.msra.mxu0 0
      %414 = vmatprep.subr.bf16.mxu0 0
      %415 = vmatpush2.bf16.msra.mxu0 0
      %416 = vmatprep.subr.bf16.mxu0 0
      %417 = vmatpush2.bf16.msra.mxu0 0
      %418 = vmatprep.subr.bf16.mxu0 0
      %419 = vmatpush2.bf16.msra.mxu0 0
      %420 = vmatprep.subr.bf16.mxu0 0
      %421 = vmatpush2.bf16.msra.mxu0 0
      %422 = vmatprep.mubr.bf16.mxu0 0
      %423 = vmatmul.mubr.bf16.gmra.mxu0 %v363
      %v424 = vpop.f32.mrf.mxu0
      %v425 = vadd.f32 0.0, %v424
      %v426 = vpop.f32.mrf.mxu0
      %v427 = vpop.f32.mrf.mxu0
      %v428 = vadd.f32 0.0, %v427
      %v429 = vpop.f32.mrf.mxu0
      %430 = vmatprep.mubr.bf16.mxu0 0
      %431 = vmatmul.mubr.bf16.gmra.mxu0 %v366
      %v432 = vpop.f32.mrf.mxu0
      %v433 = vadd.f32 0.0, %v432
      %v434 = vpop.f32.mrf.mxu0
      %v435 = vpop.f32.mrf.mxu0
      %v436 = vadd.f32 0.0, %v435
      %v437 = vpop.f32.mrf.mxu0
      %438 = vmatprep.mubr.bf16.mxu0 0
      %439 = vmatmul.mubr.bf16.gmra.mxu0 %v369
      %v440 = vpop.f32.mrf.mxu0
      %v441 = vadd.f32 0.0, %v440
      %v442 = vpop.f32.mrf.mxu0
      %v443 = vpop.f32.mrf.mxu0
      %v444 = vadd.f32 0.0, %v443
      %v445 = vpop.f32.mrf.mxu0
      %446 = vmatprep.mubr.bf16.mxu0 0
      %447 = vmatmul.mubr.bf16.gmra.mxu0 %v372
      %v448 = vpop.f32.mrf.mxu0
      %v449 = vadd.f32 0.0, %v448
      %v450 = vpop.f32.mrf.mxu0
      %v451 = vpop.f32.mrf.mxu0
      %v452 = vadd.f32 0.0, %v451
      %v453 = vpop.f32.mrf.mxu0
      %454 = vmatprep.mubr.bf16.mxu0 0
      %455 = vmatmul.mubr.bf16.gmra.mxu0 %v375
      %v456 = vpop.f32.mrf.mxu0
      %v457 = vadd.f32 0.0, %v456
      %v458 = vpop.f32.mrf.mxu0
      %v459 = vpop.f32.mrf.mxu0
      %v460 = vadd.f32 0.0, %v459
      %v461 = vpop.f32.mrf.mxu0
      %462 = vmatprep.mubr.bf16.mxu0 0
      %463 = vmatmul.mubr.bf16.gmra.mxu0 %v378
      %v464 = vpop.f32.mrf.mxu0
      %v465 = vadd.f32 0.0, %v464
      %v466 = vpop.f32.mrf.mxu0
      %v467 = vpop.f32.mrf.mxu0
      %v468 = vadd.f32 0.0, %v467
      %v469 = vpop.f32.mrf.mxu0
      %470 = vmatprep.mubr.bf16.mxu0 0
      %471 = vmatmul.mubr.bf16.gmra.mxu0 %v381
      %v472 = vpop.f32.mrf.mxu0
      %v473 = vadd.f32 0.0, %v472
      %v474 = vpop.f32.mrf.mxu0
      %v475 = vpop.f32.mrf.mxu0
      %v476 = vadd.f32 0.0, %v475
      %v477 = vpop.f32.mrf.mxu0
      %478 = vmatprep.mubr.bf16.mxu0 0
      %479 = vmatmul.mubr.bf16.gmra.mxu0 %v384
      %v480 = vpop.f32.mrf.mxu0
      %v481 = vadd.f32 0.0, %v480
      %v482 = vpop.f32.mrf.mxu0
      %v483 = vpop.f32.mrf.mxu0
      %v484 = vadd.f32 0.0, %v483
      %v485 = vpop.f32.mrf.mxu0
      %486 = vdwg.mxu0
      %v495 = vunpack.c.l.b16 %v219
      %v496 = vunpack.c.l.b16 %v220
      %v497 = vunpack.c.l.b16 %v221
      %v498 = vunpack.c.l.b16 %v222
      %v499 = vunpack.c.l.b16 %v223
      %v500 = vunpack.c.l.b16 %v224
      %v501 = vunpack.c.l.b16 %v225
      %v502 = vunpack.c.l.b16 %v226
      %v503 = vunpack.c.l.b16 %v227
      %v504 = vunpack.c.l.b16 %v228
      %v505 = vunpack.c.l.b16 %v229
      %v506 = vunpack.c.l.b16 %v230
      %v507 = vunpack.c.l.b16 %v231
      %v508 = vunpack.c.l.b16 %v232
      %v509 = vunpack.c.l.b16 %v233
      %v510 = vunpack.c.l.b16 %v234
      %v511 = vpack.c.b16 %v496, %v495
      %v512 = vpack.c.b16 %v498, %v497
      %v513 = vpack.c.b16 %v500, %v499
      %v514 = vpack.c.b16 %v502, %v501
      %v515 = vpack.c.b16 %v504, %v503
      %v516 = vpack.c.b16 %v506, %v505
      %v517 = vpack.c.b16 %v508, %v507
      %v518 = vpack.c.b16 %v510, %v509
      %v520 = vsel %vm361, %v511, 0
      %v523 = vsel %vm361, %v512, 0
      %v526 = vsel %vm361, %v513, 0
      %v529 = vsel %vm361, %v514, 0
      %v532 = vsel %vm361, %v515, 0
      %v535 = vsel %vm361, %v516, 0
      %v538 = vsel %vm361, %v517, 0
      %v541 = vsel %vm361, %v518, 0
      %v544 = vsel %vm386, %v235, 0
      %546 = vmatprep.subr.bf16.mxu0 0
      %547 = vmatpush1.bf16.msra.mxu0 0
      %548 = vmatprep.subr.bf16.mxu0 0
      %549 = vmatpush1.bf16.msra.mxu0 0
      %550 = vmatprep.subr.bf16.mxu0 0
      %551 = vmatpush1.bf16.msra.mxu0 0
      %552 = vmatprep.subr.bf16.mxu0 0
      %553 = vmatpush1.bf16.msra.mxu0 0
      %554 = vmatprep.subr.bf16.mxu0 0
      %555 = vmatpush1.bf16.msra.mxu0 0
      %556 = vmatprep.subr.bf16.mxu0 0
      %557 = vmatpush1.bf16.msra.mxu0 0
      %558 = vmatprep.subr.bf16.mxu0 0
      %559 = vmatpush1.bf16.msra.mxu0 0
      %560 = vmatprep.subr.bf16.mxu0 0
      %561 = vmatpush1.bf16.msra.mxu0 %v544
      %562 = vmatprep.subr.bf16.mxu0 0
      %563 = vmatpush2.bf16.msra.mxu0 0
      %564 = vmatprep.subr.bf16.mxu0 0
      %565 = vmatpush2.bf16.msra.mxu0 0
      %566 = vmatprep.subr.bf16.mxu0 0
      %567 = vmatpush2.bf16.msra.mxu0 0
      %568 = vmatprep.subr.bf16.mxu0 0
      %569 = vmatpush2.bf16.msra.mxu0 0
      %570 = vmatprep.subr.bf16.mxu0 0
      %571 = vmatpush2.bf16.msra.mxu0 0
      %572 = vmatprep.subr.bf16.mxu0 0
      %573 = vmatpush2.bf16.msra.mxu0 0
      %574 = vmatprep.subr.bf16.mxu0 0
      %575 = vmatpush2.bf16.msra.mxu0 0
      %576 = vmatprep.subr.bf16.mxu0 0
      %577 = vmatpush2.bf16.msra.mxu0 0
      %578 = vmatprep.mubr.bf16.mxu0 0
      %579 = vmatmul.mubr.bf16.gmra.mxu0 %v520
      %v580 = vpop.f32.mrf.mxu0
      %v581 = vadd.f32 %v425, %v580
      %v582 = vpop.f32.mrf.mxu0
      %v583 = vpop.f32.mrf.mxu0
      %v584 = vadd.f32 %v428, %v583
      %v585 = vpop.f32.mrf.mxu0
      %586 = vmatprep.mubr.bf16.mxu0 0
      %587 = vmatmul.mubr.bf16.gmra.mxu0 %v523
      %v588 = vpop.f32.mrf.mxu0
      %v589 = vadd.f32 %v433, %v588
      %v590 = vpop.f32.mrf.mxu0
      %v591 = vpop.f32.mrf.mxu0
      %v592 = vadd.f32 %v436, %v591
      %v593 = vpop.f32.mrf.mxu0
      %594 = vmatprep.mubr.bf16.mxu0 0
      %595 = vmatmul.mubr.bf16.gmra.mxu0 %v526
      %v596 = vpop.f32.mrf.mxu0
      %v597 = vadd.f32 %v441, %v596
      %v598 = vpop.f32.mrf.mxu0
      %v599 = vpop.f32.mrf.mxu0
      %v600 = vadd.f32 %v444, %v599
      %v601 = vpop.f32.mrf.mxu0
      %602 = vmatprep.mubr.bf16.mxu0 0
      %603 = vmatmul.mubr.bf16.gmra.mxu0 %v529
      %v604 = vpop.f32.mrf.mxu0
      %v605 = vadd.f32 %v449, %v604
      %v606 = vpop.f32.mrf.mxu0
      %v607 = vpop.f32.mrf.mxu0
      %v608 = vadd.f32 %v452, %v607
      %v609 = vpop.f32.mrf.mxu0
      %610 = vmatprep.mubr.bf16.mxu0 0
      %611 = vmatmul.mubr.bf16.gmra.mxu0 %v532
      %v612 = vpop.f32.mrf.mxu0
      %v613 = vadd.f32 %v457, %v612
      %v614 = vpop.f32.mrf.mxu0
      %v615 = vpop.f32.mrf.mxu0
      %v616 = vadd.f32 %v460, %v615
      %v617 = vpop.f32.mrf.mxu0
      %618 = vmatprep.mubr.bf16.mxu0 0
      %619 = vmatmul.mubr.bf16.gmra.mxu0 %v535
      %v620 = vpop.f32.mrf.mxu0
      %v621 = vadd.f32 %v465, %v620
      %v622 = vpop.f32.mrf.mxu0
      %v623 = vpop.f32.mrf.mxu0
      %v624 = vadd.f32 %v468, %v623
      %v625 = vpop.f32.mrf.mxu0
      %626 = vmatprep.mubr.bf16.mxu0 0
      %627 = vmatmul.mubr.bf16.gmra.mxu0 %v538
      %v628 = vpop.f32.mrf.mxu0
      %v629 = vadd.f32 %v473, %v628
      %v630 = vpop.f32.mrf.mxu0
      %v631 = vpop.f32.mrf.mxu0
      %v632 = vadd.f32 %v476, %v631
      %v633 = vpop.f32.mrf.mxu0
      %634 = vmatprep.mubr.bf16.mxu0 0
      %635 = vmatmul.mubr.bf16.gmra.mxu0 %v541
      %v636 = vpop.f32.mrf.mxu0
      %v637 = vadd.f32 %v481, %v636
      %v638 = vpop.f32.mrf.mxu0
      %v639 = vpop.f32.mrf.mxu0
      %v640 = vadd.f32 %v484, %v639
      %v641 = vpop.f32.mrf.mxu0
      %642 = vdwg.mxu0
      %v643 = vld [vmem:[%s218] sm:$0xc]
      %v644 = vld [vmem:[%s218 + $0x8] sm:$0x3]
      %v645 = vld [vmem:[%s218 + $0xc] sm:$0xc]
      %v646 = vld [vmem:[%s218 + $0x14] sm:$0x3]
      %v647 = vld [vmem:[%s218 + $0x18] sm:$0xc]
      %v648 = vld [vmem:[%s218 + $0x20] sm:$0x3]
      %v649 = vld [vmem:[%s218 + $0x24] sm:$0xc]
      %v650 = vld [vmem:[%s218 + $0x2c] sm:$0x3]
      %v651 = vld [vmem:[%s218 + $0x30] sm:$0xc]
      %v652 = vld [vmem:[%s218 + $0x38] sm:$0x3]
      %v653 = vld [vmem:[%s218 + $0x3c] sm:$0xc]
      %v654 = vld [vmem:[%s218 + $0x44] sm:$0x3]
      %v655 = vld [vmem:[%s218 + $0x48] sm:$0xc]
      %v656 = vld [vmem:[%s218 + $0x50] sm:$0x3]
      %v657 = vld [vmem:[%s218 + $0x54] sm:$0xc]
      %v658 = vld [vmem:[%s218 + $0x5c] sm:$0x3]
      %vm675 = vcmask 1041408
      %vm676 = vcmask 1045508
      %vm677 = vmor %vm675, %vm676
      %v678 = vrot.slane %v643, 6
      %v679 = vrot.slane %v678, 4
      %v680 = vrot.slane %v220, 6
      %v681 = vsel %vm677, %v679, %v680
      %v682 = vrot.slane %v680, 4
      %v683 = vrot.slane %v644, 6
      %v684 = vsel %vm677, %v682, %v683
      %v685 = vrot.slane %v645, 6
      %v686 = vrot.slane %v685, 4
      %v687 = vrot.slane %v222, 6
      %v688 = vsel %vm677, %v686, %v687
      %v689 = vrot.slane %v687, 4
      %v690 = vrot.slane %v646, 6
      %v691 = vsel %vm677, %v689, %v690
      %v692 = vrot.slane %v647, 6
      %v693 = vrot.slane %v692, 4
      %v694 = vrot.slane %v224, 6
      %v695 = vsel %vm677, %v693, %v694
      %v696 = vrot.slane %v694, 4
      %v697 = vrot.slane %v648, 6
      %v698 = vsel %vm677, %v696, %v697
      %v699 = vrot.slane %v649, 6
      %v700 = vrot.slane %v699, 4
      %v701 = vrot.slane %v226, 6
      %v702 = vsel %vm677, %v700, %v701
      %v703 = vrot.slane %v701, 4
      %v704 = vrot.slane %v650, 6
      %v705 = vsel %vm677, %v703, %v704
      %v706 = vrot.slane %v651, 6
      %v707 = vrot.slane %v706, 4
      %v708 = vrot.slane %v228, 6
      %v709 = vsel %vm677, %v707, %v708
      %v710 = vrot.slane %v708, 4
      %v711 = vrot.slane %v652, 6
      %v712 = vsel %vm677, %v710, %v711
      %v713 = vrot.slane %v653, 6
      %v714 = vrot.slane %v713, 4
      %v715 = vrot.slane %v230, 6
      %v716 = vsel %vm677, %v714, %v715
      %v717 = vrot.slane %v715, 4
      %v718 = vrot.slane %v654, 6
      %v719 = vsel %vm677, %v717, %v718
      %v720 = vrot.slane %v655, 6
      %v721 = vrot.slane %v720, 4
      %v722 = vrot.slane %v232, 6
      %v723 = vsel %vm677, %v721, %v722
      %v724 = vrot.slane %v722, 4
      %v725 = vrot.slane %v656, 6
      %v726 = vsel %vm677, %v724, %v725
      %v727 = vrot.slane %v657, 6
      %v728 = vrot.slane %v727, 4
      %v729 = vrot.slane %v234, 6
      %v730 = vsel %vm677, %v728, %v729
      %v731 = vrot.slane %v729, 4
      %v732 = vrot.slane %v658, 6
      %v733 = vsel %vm677, %v731, %v732
      %s734 = scalar_lea.vmem %s1, 4
      %v735 = vld [vmem:[%s734] sm:$0x3]
      %v736 = vunpack.c.l.b16 %v681
      %v737 = vunpack.c.l.b16 %v684
      %v738 = vunpack.c.l.b16 %v688
      %v739 = vunpack.c.l.b16 %v691
      %v740 = vunpack.c.l.b16 %v695
      %v741 = vunpack.c.l.b16 %v698
      %v742 = vunpack.c.l.b16 %v702
      %v743 = vunpack.c.l.b16 %v705
      %v744 = vunpack.c.l.b16 %v709
      %v745 = vunpack.c.l.b16 %v712
      %v746 = vunpack.c.l.b16 %v716
      %v747 = vunpack.c.l.b16 %v719
      %v748 = vunpack.c.l.b16 %v723
      %v749 = vunpack.c.l.b16 %v726
      %v750 = vunpack.c.l.b16 %v730
      %v751 = vunpack.c.l.b16 %v733
      %v752 = vpack.c.b16 %v737, %v736
      %v753 = vpack.c.b16 %v739, %v738
      %v754 = vpack.c.b16 %v741, %v740
      %v755 = vpack.c.b16 %v743, %v742
      %v756 = vpack.c.b16 %v745, %v744
      %v757 = vpack.c.b16 %v747, %v746
      %v758 = vpack.c.b16 %v749, %v748
      %v759 = vpack.c.b16 %v751, %v750
      %v761 = vsel %vm361, %v752, 0
      %v764 = vsel %vm361, %v753, 0
      %v767 = vsel %vm361, %v754, 0
      %v770 = vsel %vm361, %v755, 0
      %v773 = vsel %vm361, %v756, 0
      %v776 = vsel %vm361, %v757, 0
      %v779 = vsel %vm361, %v758, 0
      %v782 = vsel %vm361, %v759, 0
      %v785 = vsel %vm386, %v735, 0
      %787 = vmatprep.subr.bf16.mxu0 0
      %788 = vmatpush1.bf16.msra.mxu0 0
      %789 = vmatprep.subr.bf16.mxu0 0
      %790 = vmatpush1.bf16.msra.mxu0 0
      %791 = vmatprep.subr.bf16.mxu0 0
      %792 = vmatpush1.bf16.msra.mxu0 0
      %793 = vmatprep.subr.bf16.mxu0 0
      %794 = vmatpush1.bf16.msra.mxu0 0
      %795 = vmatprep.subr.bf16.mxu0 0
      %796 = vmatpush1.bf16.msra.mxu0 0
      %797 = vmatprep.subr.bf16.mxu0 0
      %798 = vmatpush1.bf16.msra.mxu0 0
      %799 = vmatprep.subr.bf16.mxu0 0
      %800 = vmatpush1.bf16.msra.mxu0 0
      %801 = vmatprep.subr.bf16.mxu0 0
      %802 = vmatpush1.bf16.msra.mxu0 %v785
      %803 = vmatprep.subr.bf16.mxu0 0
      %804 = vmatpush2.bf16.msra.mxu0 0
      %805 = vmatprep.subr.bf16.mxu0 0
      %806 = vmatpush2.bf16.msra.mxu0 0
      %807 = vmatprep.subr.bf16.mxu0 0
      %808 = vmatpush2.bf16.msra.mxu0 0
      %809 = vmatprep.subr.bf16.mxu0 0
      %810 = vmatpush2.bf16.msra.mxu0 0
      %811 = vmatprep.subr.bf16.mxu0 0
      %812 = vmatpush2.bf16.msra.mxu0 0
      %813 = vmatprep.subr.bf16.mxu0 0
      %814 = vmatpush2.bf16.msra.mxu0 0
      %815 = vmatprep.subr.bf16.mxu0 0
      %816 = vmatpush2.bf16.msra.mxu0 0
      %817 = vmatprep.subr.bf16.mxu0 0
      %818 = vmatpush2.bf16.msra.mxu0 0
      %819 = vmatprep.mubr.bf16.mxu0 0
      %820 = vmatmul.mubr.bf16.gmra.mxu0 %v761
      %v821 = vpop.f32.mrf.mxu0
      %v822 = vadd.f32 0.0, %v821
      %v823 = vpop.f32.mrf.mxu0
      %v824 = vpop.f32.mrf.mxu0
      %v825 = vadd.f32 0.0, %v824
      %v826 = vpop.f32.mrf.mxu0
      %827 = vmatprep.mubr.bf16.mxu0 0
      %828 = vmatmul.mubr.bf16.gmra.mxu0 %v764
      %v829 = vpop.f32.mrf.mxu0
      %v830 = vadd.f32 0.0, %v829
      %v831 = vpop.f32.mrf.mxu0
      %v832 = vpop.f32.mrf.mxu0
      %v833 = vadd.f32 0.0, %v832
      %v834 = vpop.f32.mrf.mxu0
      %835 = vmatprep.mubr.bf16.mxu0 0
      %836 = vmatmul.mubr.bf16.gmra.mxu0 %v767
      %v837 = vpop.f32.mrf.mxu0
      %v838 = vadd.f32 0.0, %v837
      %v839 = vpop.f32.mrf.mxu0
      %v840 = vpop.f32.mrf.mxu0
      %v841 = vadd.f32 0.0, %v840
      %v842 = vpop.f32.mrf.mxu0
      %843 = vmatprep.mubr.bf16.mxu0 0
      %844 = vmatmul.mubr.bf16.gmra.mxu0 %v770
      %v845 = vpop.f32.mrf.mxu0
      %v846 = vadd.f32 0.0, %v845
      %v847 = vpop.f32.mrf.mxu0
      %v848 = vpop.f32.mrf.mxu0
      %v849 = vadd.f32 0.0, %v848
      %v850 = vpop.f32.mrf.mxu0
      %851 = vmatprep.mubr.bf16.mxu0 0
      %852 = vmatmul.mubr.bf16.gmra.mxu0 %v773
      %v853 = vpop.f32.mrf.mxu0
      %v854 = vadd.f32 0.0, %v853
      %v855 = vpop.f32.mrf.mxu0
      %v856 = vpop.f32.mrf.mxu0
      %v857 = vadd.f32 0.0, %v856
      %v858 = vpop.f32.mrf.mxu0
      %859 = vmatprep.mubr.bf16.mxu0 0
      %860 = vmatmul.mubr.bf16.gmra.mxu0 %v776
      %v861 = vpop.f32.mrf.mxu0
      %v862 = vadd.f32 0.0, %v861
      %v863 = vpop.f32.mrf.mxu0
      %v864 = vpop.f32.mrf.mxu0
      %v865 = vadd.f32 0.0, %v864
      %v866 = vpop.f32.mrf.mxu0
      %867 = vmatprep.mubr.bf16.mxu0 0
      %868 = vmatmul.mubr.bf16.gmra.mxu0 %v779
      %v869 = vpop.f32.mrf.mxu0
      %v870 = vadd.f32 0.0, %v869
      %v871 = vpop.f32.mrf.mxu0
      %v872 = vpop.f32.mrf.mxu0
      %v873 = vadd.f32 0.0, %v872
      %v874 = vpop.f32.mrf.mxu0
      %875 = vmatprep.mubr.bf16.mxu0 0
      %876 = vmatmul.mubr.bf16.gmra.mxu0 %v782
      %v877 = vpop.f32.mrf.mxu0
      %v878 = vadd.f32 0.0, %v877
      %v879 = vpop.f32.mrf.mxu0
      %v880 = vpop.f32.mrf.mxu0
      %v881 = vadd.f32 0.0, %v880
      %v882 = vpop.f32.mrf.mxu0
      %883 = vdwg.mxu0
      %v884 = vadd.f32 %v581, %v822
      %v885 = vadd.f32 %v584, %v825
      %v886 = vadd.f32 %v589, %v830
      %v887 = vadd.f32 %v592, %v833
      %v888 = vadd.f32 %v597, %v838
      %v889 = vadd.f32 %v600, %v841
      %v890 = vadd.f32 %v605, %v846
      %v891 = vadd.f32 %v608, %v849
      %v892 = vadd.f32 %v613, %v854
      %v893 = vadd.f32 %v616, %v857
      %v894 = vadd.f32 %v621, %v862
      %v895 = vadd.f32 %v624, %v865
      %v896 = vadd.f32 %v629, %v870
      %v897 = vadd.f32 %v632, %v873
      %v898 = vadd.f32 %v637, %v878
      %v899 = vadd.f32 %v640, %v881
      %s900 = sadd.s32 %s215, 2
      %s901 = smul.u32 %s900, 3
      %s902 = smul.addr %s901, 4
      %s903 = scalar_lea.vmem %s196, %s902
      %v904 = vld [vmem:[%s903] sm:$0xf]
      %v905 = vld [vmem:[%s903 + $0x4] sm:$0xf]
      %v906 = vld [vmem:[%s903 + $0xc] sm:$0xf]
      %v907 = vld [vmem:[%s903 + $0x10] sm:$0xf]
      %v908 = vld [vmem:[%s903 + $0x18] sm:$0xf]
      %v909 = vld [vmem:[%s903 + $0x1c] sm:$0xf]
      %v910 = vld [vmem:[%s903 + $0x24] sm:$0xf]
      %v911 = vld [vmem:[%s903 + $0x28] sm:$0xf]
      %v912 = vld [vmem:[%s903 + $0x30] sm:$0xf]
      %v913 = vld [vmem:[%s903 + $0x34] sm:$0xf]
      %v914 = vld [vmem:[%s903 + $0x3c] sm:$0xf]
      %v915 = vld [vmem:[%s903 + $0x40] sm:$0xf]
      %v916 = vld [vmem:[%s903 + $0x48] sm:$0xf]
      %v917 = vld [vmem:[%s903 + $0x4c] sm:$0xf]
      %v918 = vld [vmem:[%s903 + $0x54] sm:$0xf]
      %v919 = vld [vmem:[%s903 + $0x58] sm:$0xf]
      %s920 = scalar_lea.vmem %s1, 6
      %v921 = vld [vmem:[%s920] sm:$0x3]
      %v938 = vunpack.c.l.b16 %v904
      %v939 = vunpack.c.l.b16 %v905
      %v940 = vunpack.c.l.b16 %v906
      %v941 = vunpack.c.l.b16 %v907
      %v942 = vunpack.c.l.b16 %v908
      %v943 = vunpack.c.l.b16 %v909
      %v944 = vunpack.c.l.b16 %v910
      %v945 = vunpack.c.l.b16 %v911
      %v946 = vunpack.c.l.b16 %v912
      %v947 = vunpack.c.l.b16 %v913
      %v948 = vunpack.c.l.b16 %v914
      %v949 = vunpack.c.l.b16 %v915
      %v950 = vunpack.c.l.b16 %v916
      %v951 = vunpack.c.l.b16 %v917
      %v952 = vunpack.c.l.b16 %v918
      %v953 = vunpack.c.l.b16 %v919
      %v954 = vpack.c.b16 %v939, %v938
      %v955 = vpack.c.b16 %v941, %v940
      %v956 = vpack.c.b16 %v943, %v942
      %v957 = vpack.c.b16 %v945, %v944
      %v958 = vpack.c.b16 %v947, %v946
      %v959 = vpack.c.b16 %v949, %v948
      %v960 = vpack.c.b16 %v951, %v950
      %v961 = vpack.c.b16 %v953, %v952
      %v963 = vsel %vm361, %v954, 0
      %v966 = vsel %vm361, %v955, 0
      %v969 = vsel %vm361, %v956, 0
      %v972 = vsel %vm361, %v957, 0
      %v975 = vsel %vm361, %v958, 0
      %v978 = vsel %vm361, %v959, 0
      %v981 = vsel %vm361, %v960, 0
      %v984 = vsel %vm361, %v961, 0
      %v987 = vsel %vm386, %v921, 0
      %989 = vmatprep.subr.bf16.mxu0 0
      %990 = vmatpush1.bf16.msra.mxu0 0
      %991 = vmatprep.subr.bf16.mxu0 0
      %992 = vmatpush1.bf16.msra.mxu0 0
      %993 = vmatprep.subr.bf16.mxu0 0
      %994 = vmatpush1.bf16.msra.mxu0 0
      %995 = vmatprep.subr.bf16.mxu0 0
      %996 = vmatpush1.bf16.msra.mxu0 0
      %997 = vmatprep.subr.bf16.mxu0 0
      %998 = vmatpush1.bf16.msra.mxu0 0
      %999 = vmatprep.subr.bf16.mxu0 0
      %1000 = vmatpush1.bf16.msra.mxu0 0
      %1001 = vmatprep.subr.bf16.mxu0 0
      %1002 = vmatpush1.bf16.msra.mxu0 0
      %1003 = vmatprep.subr.bf16.mxu0 0
      %1004 = vmatpush1.bf16.msra.mxu0 %v987
      %1005 = vmatprep.subr.bf16.mxu0 0
      %1006 = vmatpush2.bf16.msra.mxu0 0
      %1007 = vmatprep.subr.bf16.mxu0 0
      %1008 = vmatpush2.bf16.msra.mxu0 0
      %1009 = vmatprep.subr.bf16.mxu0 0
      %1010 = vmatpush2.bf16.msra.mxu0 0
      %1011 = vmatprep.subr.bf16.mxu0 0
      %1012 = vmatpush2.bf16.msra.mxu0 0
      %1013 = vmatprep.subr.bf16.mxu0 0
      %1014 = vmatpush2.bf16.msra.mxu0 0
      %1015 = vmatprep.subr.bf16.mxu0 0
      %1016 = vmatpush2.bf16.msra.mxu0 0
      %1017 = vmatprep.subr.bf16.mxu0 0
      %1018 = vmatpush2.bf16.msra.mxu0 0
      %1019 = vmatprep.subr.bf16.mxu0 0
      %1020 = vmatpush2.bf16.msra.mxu0 0
      %1021 = vmatprep.mubr.bf16.mxu0 0
      %1022 = vmatmul.mubr.bf16.gmra.mxu0 %v963
      %v1023 = vpop.f32.mrf.mxu0
      %v1024 = vadd.f32 0.0, %v1023
      %v1025 = vpop.f32.mrf.mxu0
      %v1026 = vpop.f32.mrf.mxu0
      %v1027 = vadd.f32 0.0, %v1026
      %v1028 = vpop.f32.mrf.mxu0
      %1029 = vmatprep.mubr.bf16.mxu0 0
      %1030 = vmatmul.mubr.bf16.gmra.mxu0 %v966
      %v1031 = vpop.f32.mrf.mxu0
      %v1032 = vadd.f32 0.0, %v1031
      %v1033 = vpop.f32.mrf.mxu0
      %v1034 = vpop.f32.mrf.mxu0
      %v1035 = vadd.f32 0.0, %v1034
      %v1036 = vpop.f32.mrf.mxu0
      %1037 = vmatprep.mubr.bf16.mxu0 0
      %1038 = vmatmul.mubr.bf16.gmra.mxu0 %v969
      %v1039 = vpop.f32.mrf.mxu0
      %v1040 = vadd.f32 0.0, %v1039
      %v1041 = vpop.f32.mrf.mxu0
      %v1042 = vpop.f32.mrf.mxu0
      %v1043 = vadd.f32 0.0, %v1042
      %v1044 = vpop.f32.mrf.mxu0
      %1045 = vmatprep.mubr.bf16.mxu0 0
      %1046 = vmatmul.mubr.bf16.gmra.mxu0 %v972
      %v1047 = vpop.f32.mrf.mxu0
      %v1048 = vadd.f32 0.0, %v1047
      %v1049 = vpop.f32.mrf.mxu0
      %v1050 = vpop.f32.mrf.mxu0
      %v1051 = vadd.f32 0.0, %v1050
      %v1052 = vpop.f32.mrf.mxu0
      %1053 = vmatprep.mubr.bf16.mxu0 0
      %1054 = vmatmul.mubr.bf16.gmra.mxu0 %v975
      %v1055 = vpop.f32.mrf.mxu0
      %v1056 = vadd.f32 0.0, %v1055
      %v1057 = vpop.f32.mrf.mxu0
      %v1058 = vpop.f32.mrf.mxu0
      %v1059 = vadd.f32 0.0, %v1058
      %v1060 = vpop.f32.mrf.mxu0
      %1061 = vmatprep.mubr.bf16.mxu0 0
      %1062 = vmatmul.mubr.bf16.gmra.mxu0 %v978
      %v1063 = vpop.f32.mrf.mxu0
      %v1064 = vadd.f32 0.0, %v1063
      %v1065 = vpop.f32.mrf.mxu0
      %v1066 = vpop.f32.mrf.mxu0
      %v1067 = vadd.f32 0.0, %v1066
      %v1068 = vpop.f32.mrf.mxu0
      %1069 = vmatprep.mubr.bf16.mxu0 0
      %1070 = vmatmul.mubr.bf16.gmra.mxu0 %v981
      %v1071 = vpop.f32.mrf.mxu0
      %v1072 = vadd.f32 0.0, %v1071
      %v1073 = vpop.f32.mrf.mxu0
      %v1074 = vpop.f32.mrf.mxu0
      %v1075 = vadd.f32 0.0, %v1074
      %v1076 = vpop.f32.mrf.mxu0
      %1077 = vmatprep.mubr.bf16.mxu0 0
      %1078 = vmatmul.mubr.bf16.gmra.mxu0 %v984
      %v1079 = vpop.f32.mrf.mxu0
      %v1080 = vadd.f32 0.0, %v1079
      %v1081 = vpop.f32.mrf.mxu0
      %v1082 = vpop.f32.mrf.mxu0
      %v1083 = vadd.f32 0.0, %v1082
      %v1084 = vpop.f32.mrf.mxu0
      %1085 = vdwg.mxu0
      %v1086 = vadd.f32 %v884, %v1024
      %v1087 = vadd.f32 %v885, %v1027
      %v1088 = vadd.f32 %v886, %v1032
      %v1089 = vadd.f32 %v887, %v1035
      %v1090 = vadd.f32 %v888, %v1040
      %v1091 = vadd.f32 %v889, %v1043
      %v1092 = vadd.f32 %v890, %v1048
      %v1093 = vadd.f32 %v891, %v1051
      %v1094 = vadd.f32 %v892, %v1056
      %v1095 = vadd.f32 %v893, %v1059
      %v1096 = vadd.f32 %v894, %v1064
      %v1097 = vadd.f32 %v895, %v1067
      %v1098 = vadd.f32 %v896, %v1072
      %v1099 = vadd.f32 %v897, %v1075
      %v1100 = vadd.f32 %v898, %v1080
      %v1101 = vadd.f32 %v899, %v1083
      %v1102 = vld [vmem:[%s903] sm:$0xe]
      %v1103 = vld [vmem:[%s903 + $0x4] sm:$0xf]
      %v1104 = vld [vmem:[%s903 + $0x8] sm:$0x1]
      %v1105 = vld [vmem:[%s903 + $0xc] sm:$0xe]
      %v1106 = vld [vmem:[%s903 + $0x10] sm:$0xf]
      %v1107 = vld [vmem:[%s903 + $0x14] sm:$0x1]
      %v1108 = vld [vmem:[%s903 + $0x18] sm:$0xe]
      %v1109 = vld [vmem:[%s903 + $0x1c] sm:$0xf]
      %v1110 = vld [vmem:[%s903 + $0x20] sm:$0x1]
      %v1111 = vld [vmem:[%s903 + $0x24] sm:$0xe]
      %v1112 = vld [vmem:[%s903 + $0x28] sm:$0xf]
      %v1113 = vld [vmem:[%s903 + $0x2c] sm:$0x1]
      %v1114 = vld [vmem:[%s903 + $0x30] sm:$0xe]
      %v1115 = vld [vmem:[%s903 + $0x34] sm:$0xf]
      %v1116 = vld [vmem:[%s903 + $0x38] sm:$0x1]
      %v1117 = vld [vmem:[%s903 + $0x3c] sm:$0xe]
      %v1118 = vld [vmem:[%s903 + $0x40] sm:$0xf]
      %v1119 = vld [vmem:[%s903 + $0x44] sm:$0x1]
      %v1120 = vld [vmem:[%s903 + $0x48] sm:$0xe]
      %v1121 = vld [vmem:[%s903 + $0x4c] sm:$0xf]
      %v1122 = vld [vmem:[%s903 + $0x50] sm:$0x1]
      %v1123 = vld [vmem:[%s903 + $0x54] sm:$0xe]
      %v1124 = vld [vmem:[%s903 + $0x58] sm:$0xf]
      %v1125 = vld [vmem:[%s903 + $0x5c] sm:$0x1]
      %v1150 = vrot.slane %v1102, 5
      %v1151 = vrot.slane %v1150, 4
      %v1152 = vrot.slane %v1103, 5
      %v1153 = vsel %vm278, %v1151, %v1152
      %v1154 = vrot.slane %v1152, 4
      %v1155 = vrot.slane %v1104, 5
      %v1156 = vsel %vm278, %v1154, %v1155
      %v1157 = vrot.slane %v1105, 5
      %v1158 = vrot.slane %v1157, 4
      %v1159 = vrot.slane %v1106, 5
      %v1160 = vsel %vm278, %v1158, %v1159
      %v1161 = vrot.slane %v1159, 4
      %v1162 = vrot.slane %v1107, 5
      %v1163 = vsel %vm278, %v1161, %v1162
      %v1164 = vrot.slane %v1108, 5
      %v1165 = vrot.slane %v1164, 4
      %v1166 = vrot.slane %v1109, 5
      %v1167 = vsel %vm278, %v1165, %v1166
      %v1168 = vrot.slane %v1166, 4
      %v1169 = vrot.slane %v1110, 5
      %v1170 = vsel %vm278, %v1168, %v1169
      %v1171 = vrot.slane %v1111, 5
      %v1172 = vrot.slane %v1171, 4
      %v1173 = vrot.slane %v1112, 5
      %v1174 = vsel %vm278, %v1172, %v1173
      %v1175 = vrot.slane %v1173, 4
      %v1176 = vrot.slane %v1113, 5
      %v1177 = vsel %vm278, %v1175, %v1176
      %v1178 = vrot.slane %v1114, 5
      %v1179 = vrot.slane %v1178, 4
      %v1180 = vrot.slane %v1115, 5
      %v1181 = vsel %vm278, %v1179, %v1180
      %v1182 = vrot.slane %v1180, 4
      %v1183 = vrot.slane %v1116, 5
      %v1184 = vsel %vm278, %v1182, %v1183
      %v1185 = vrot.slane %v1117, 5
      %v1186 = vrot.slane %v1185, 4
      %v1187 = vrot.slane %v1118, 5
      %v1188 = vsel %vm278, %v1186, %v1187
      %v1189 = vrot.slane %v1187, 4
      %v1190 = vrot.slane %v1119, 5
      %v1191 = vsel %vm278, %v1189, %v1190
      %v1192 = vrot.slane %v1120, 5
      %v1193 = vrot.slane %v1192, 4
      %v1194 = vrot.slane %v1121, 5
      %v1195 = vsel %vm278, %v1193, %v1194
      %v1196 = vrot.slane %v1194, 4
      %v1197 = vrot.slane %v1122, 5
      %v1198 = vsel %vm278, %v1196, %v1197
      %v1199 = vrot.slane %v1123, 5
      %v1200 = vrot.slane %v1199, 4
      %v1201 = vrot.slane %v1124, 5
      %v1202 = vsel %vm278, %v1200, %v1201
      %v1203 = vrot.slane %v1201, 4
      %v1204 = vrot.slane %v1125, 5
      %v1205 = vsel %vm278, %v1203, %v1204
      %s1206 = scalar_lea.vmem %s1, 8
      %v1207 = vld [vmem:[%s1206] sm:$0x3]
      %v1208 = vunpack.c.l.b16 %v1153
      %v1209 = vunpack.c.l.b16 %v1156
      %v1210 = vunpack.c.l.b16 %v1160
      %v1211 = vunpack.c.l.b16 %v1163
      %v1212 = vunpack.c.l.b16 %v1167
      %v1213 = vunpack.c.l.b16 %v1170
      %v1214 = vunpack.c.l.b16 %v1174
      %v1215 = vunpack.c.l.b16 %v1177
      %v1216 = vunpack.c.l.b16 %v1181
      %v1217 = vunpack.c.l.b16 %v1184
      %v1218 = vunpack.c.l.b16 %v1188
      %v1219 = vunpack.c.l.b16 %v1191
      %v1220 = vunpack.c.l.b16 %v1195
      %v1221 = vunpack.c.l.b16 %v1198
      %v1222 = vunpack.c.l.b16 %v1202
      %v1223 = vunpack.c.l.b16 %v1205
      %v1224 = vpack.c.b16 %v1209, %v1208
      %v1225 = vpack.c.b16 %v1211, %v1210
      %v1226 = vpack.c.b16 %v1213, %v1212
      %v1227 = vpack.c.b16 %v1215, %v1214
      %v1228 = vpack.c.b16 %v1217, %v1216
      %v1229 = vpack.c.b16 %v1219, %v1218
      %v1230 = vpack.c.b16 %v1221, %v1220
      %v1231 = vpack.c.b16 %v1223, %v1222
      %v1233 = vsel %vm361, %v1224, 0
      %v1236 = vsel %vm361, %v1225, 0
      %v1239 = vsel %vm361, %v1226, 0
      %v1242 = vsel %vm361, %v1227, 0
      %v1245 = vsel %vm361, %v1228, 0
      %v1248 = vsel %vm361, %v1229, 0
      %v1251 = vsel %vm361, %v1230, 0
      %v1254 = vsel %vm361, %v1231, 0
      %v1257 = vsel %vm386, %v1207, 0
      %1259 = vmatprep.subr.bf16.mxu0 0
      %1260 = vmatpush1.bf16.msra.mxu0 0
      %1261 = vmatprep.subr.bf16.mxu0 0
      %1262 = vmatpush1.bf16.msra.mxu0 0
      %1263 = vmatprep.subr.bf16.mxu0 0
      %1264 = vmatpush1.bf16.msra.mxu0 0
      %1265 = vmatprep.subr.bf16.mxu0 0
      %1266 = vmatpush1.bf16.msra.mxu0 0
      %1267 = vmatprep.subr.bf16.mxu0 0
      %1268 = vmatpush1.bf16.msra.mxu0 0
      %1269 = vmatprep.subr.bf16.mxu0 0
      %1270 = vmatpush1.bf16.msra.mxu0 0
      %1271 = vmatprep.subr.bf16.mxu0 0
      %1272 = vmatpush1.bf16.msra.mxu0 0
      %1273 = vmatprep.subr.bf16.mxu0 0
      %1274 = vmatpush1.bf16.msra.mxu0 %v1257
      %1275 = vmatprep.subr.bf16.mxu0 0
      %1276 = vmatpush2.bf16.msra.mxu0 0
      %1277 = vmatprep.subr.bf16.mxu0 0
      %1278 = vmatpush2.bf16.msra.mxu0 0
      %1279 = vmatprep.subr.bf16.mxu0 0
      %1280 = vmatpush2.bf16.msra.mxu0 0
      %1281 = vmatprep.subr.bf16.mxu0 0
      %1282 = vmatpush2.bf16.msra.mxu0 0
      %1283 = vmatprep.subr.bf16.mxu0 0
      %1284 = vmatpush2.bf16.msra.mxu0 0
      %1285 = vmatprep.subr.bf16.mxu0 0
      %1286 = vmatpush2.bf16.msra.mxu0 0
      %1287 = vmatprep.subr.bf16.mxu0 0
      %1288 = vmatpush2.bf16.msra.mxu0 0
      %1289 = vmatprep.subr.bf16.mxu0 0
      %1290 = vmatpush2.bf16.msra.mxu0 0
      %1291 = vmatprep.mubr.bf16.mxu0 0
      %1292 = vmatmul.mubr.bf16.gmra.mxu0 %v1233
      %v1293 = vpop.f32.mrf.mxu0
      %v1294 = vadd.f32 0.0, %v1293
      %v1295 = vpop.f32.mrf.mxu0
      %v1296 = vpop.f32.mrf.mxu0
      %v1297 = vadd.f32 0.0, %v1296
      %v1298 = vpop.f32.mrf.mxu0
      %1299 = vmatprep.mubr.bf16.mxu0 0
      %1300 = vmatmul.mubr.bf16.gmra.mxu0 %v1236
      %v1301 = vpop.f32.mrf.mxu0
      %v1302 = vadd.f32 0.0, %v1301
      %v1303 = vpop.f32.mrf.mxu0
      %v1304 = vpop.f32.mrf.mxu0
      %v1305 = vadd.f32 0.0, %v1304
      %v1306 = vpop.f32.mrf.mxu0
      %1307 = vmatprep.mubr.bf16.mxu0 0
      %1308 = vmatmul.mubr.bf16.gmra.mxu0 %v1239
      %v1309 = vpop.f32.mrf.mxu0
      %v1310 = vadd.f32 0.0, %v1309
      %v1311 = vpop.f32.mrf.mxu0
      %v1312 = vpop.f32.mrf.mxu0
      %v1313 = vadd.f32 0.0, %v1312
      %v1314 = vpop.f32.mrf.mxu0
      %1315 = vmatprep.mubr.bf16.mxu0 0
      %1316 = vmatmul.mubr.bf16.gmra.mxu0 %v1242
      %v1317 = vpop.f32.mrf.mxu0
      %v1318 = vadd.f32 0.0, %v1317
      %v1319 = vpop.f32.mrf.mxu0
      %v1320 = vpop.f32.mrf.mxu0
      %v1321 = vadd.f32 0.0, %v1320
      %v1322 = vpop.f32.mrf.mxu0
      %1323 = vmatprep.mubr.bf16.mxu0 0
      %1324 = vmatmul.mubr.bf16.gmra.mxu0 %v1245
      %v1325 = vpop.f32.mrf.mxu0
      %v1326 = vadd.f32 0.0, %v1325
      %v1327 = vpop.f32.mrf.mxu0
      %v1328 = vpop.f32.mrf.mxu0
      %v1329 = vadd.f32 0.0, %v1328
      %v1330 = vpop.f32.mrf.mxu0
      %1331 = vmatprep.mubr.bf16.mxu0 0
      %1332 = vmatmul.mubr.bf16.gmra.mxu0 %v1248
      %v1333 = vpop.f32.mrf.mxu0
      %v1334 = vadd.f32 0.0, %v1333
      %v1335 = vpop.f32.mrf.mxu0
      %v1336 = vpop.f32.mrf.mxu0
      %v1337 = vadd.f32 0.0, %v1336
      %v1338 = vpop.f32.mrf.mxu0
      %1339 = vmatprep.mubr.bf16.mxu0 0
      %1340 = vmatmul.mubr.bf16.gmra.mxu0 %v1251
      %v1341 = vpop.f32.mrf.mxu0
      %v1342 = vadd.f32 0.0, %v1341
      %v1343 = vpop.f32.mrf.mxu0
      %v1344 = vpop.f32.mrf.mxu0
      %v1345 = vadd.f32 0.0, %v1344
      %v1346 = vpop.f32.mrf.mxu0
      %1347 = vmatprep.mubr.bf16.mxu0 0
      %1348 = vmatmul.mubr.bf16.gmra.mxu0 %v1254
      %v1349 = vpop.f32.mrf.mxu0
      %v1350 = vadd.f32 0.0, %v1349
      %v1351 = vpop.f32.mrf.mxu0
      %v1352 = vpop.f32.mrf.mxu0
      %v1353 = vadd.f32 0.0, %v1352
      %v1354 = vpop.f32.mrf.mxu0
      %1355 = vdwg.mxu0
      %v1356 = vadd.f32 %v1086, %v1294
      %v1357 = vadd.f32 %v1087, %v1297
      %v1358 = vadd.f32 %v1088, %v1302
      %v1359 = vadd.f32 %v1089, %v1305
      %v1360 = vadd.f32 %v1090, %v1310
      %v1361 = vadd.f32 %v1091, %v1313
      %v1362 = vadd.f32 %v1092, %v1318
      %v1363 = vadd.f32 %v1093, %v1321
      %v1364 = vadd.f32 %v1094, %v1326
      %v1365 = vadd.f32 %v1095, %v1329
      %v1366 = vadd.f32 %v1096, %v1334
      %v1367 = vadd.f32 %v1097, %v1337
      %v1368 = vadd.f32 %v1098, %v1342
      %v1369 = vadd.f32 %v1099, %v1345
      %v1370 = vadd.f32 %v1100, %v1350
      %v1371 = vadd.f32 %v1101, %v1353
      %v1372 = vld [vmem:[%s903] sm:$0xc]
      %v1373 = vld [vmem:[%s903 + $0x8] sm:$0x3]
      %v1374 = vld [vmem:[%s903 + $0xc] sm:$0xc]
      %v1375 = vld [vmem:[%s903 + $0x14] sm:$0x3]
      %v1376 = vld [vmem:[%s903 + $0x18] sm:$0xc]
      %v1377 = vld [vmem:[%s903 + $0x20] sm:$0x3]
      %v1378 = vld [vmem:[%s903 + $0x24] sm:$0xc]
      %v1379 = vld [vmem:[%s903 + $0x2c] sm:$0x3]
      %v1380 = vld [vmem:[%s903 + $0x30] sm:$0xc]
      %v1381 = vld [vmem:[%s903 + $0x38] sm:$0x3]
      %v1382 = vld [vmem:[%s903 + $0x3c] sm:$0xc]
      %v1383 = vld [vmem:[%s903 + $0x44] sm:$0x3]
      %v1384 = vld [vmem:[%s903 + $0x48] sm:$0xc]
      %v1385 = vld [vmem:[%s903 + $0x50] sm:$0x3]
      %v1386 = vld [vmem:[%s903 + $0x54] sm:$0xc]
      %v1387 = vld [vmem:[%s903 + $0x5c] sm:$0x3]
      %v1404 = vrot.slane %v1372, 6
      %v1405 = vrot.slane %v1404, 4
      %v1406 = vrot.slane %v1103, 6
      %v1407 = vsel %vm677, %v1405, %v1406
      %v1408 = vrot.slane %v1406, 4
      %v1409 = vrot.slane %v1373, 6
      %v1410 = vsel %vm677, %v1408, %v1409
      %v1411 = vrot.slane %v1374, 6
      %v1412 = vrot.slane %v1411, 4
      %v1413 = vrot.slane %v1106, 6
      %v1414 = vsel %vm677, %v1412, %v1413
      %v1415 = vrot.slane %v1413, 4
      %v1416 = vrot.slane %v1375, 6
      %v1417 = vsel %vm677, %v1415, %v1416
      %v1418 = vrot.slane %v1376, 6
      %v1419 = vrot.slane %v1418, 4
      %v1420 = vrot.slane %v1109, 6
      %v1421 = vsel %vm677, %v1419, %v1420
      %v1422 = vrot.slane %v1420, 4
      %v1423 = vrot.slane %v1377, 6
      %v1424 = vsel %vm677, %v1422, %v1423
      %v1425 = vrot.slane %v1378, 6
      %v1426 = vrot.slane %v1425, 4
      %v1427 = vrot.slane %v1112, 6
      %v1428 = vsel %vm677, %v1426, %v1427
      %v1429 = vrot.slane %v1427, 4
      %v1430 = vrot.slane %v1379, 6
      %v1431 = vsel %vm677, %v1429, %v1430
      %v1432 = vrot.slane %v1380, 6
      %v1433 = vrot.slane %v1432, 4
      %v1434 = vrot.slane %v1115, 6
      %v1435 = vsel %vm677, %v1433, %v1434
      %v1436 = vrot.slane %v1434, 4
      %v1437 = vrot.slane %v1381, 6
      %v1438 = vsel %vm677, %v1436, %v1437
      %v1439 = vrot.slane %v1382, 6
      %v1440 = vrot.slane %v1439, 4
      %v1441 = vrot.slane %v1118, 6
      %v1442 = vsel %vm677, %v1440, %v1441
      %v1443 = vrot.slane %v1441, 4
      %v1444 = vrot.slane %v1383, 6
      %v1445 = vsel %vm677, %v1443, %v1444
      %v1446 = vrot.slane %v1384, 6
      %v1447 = vrot.slane %v1446, 4
      %v1448 = vrot.slane %v1121, 6
      %v1449 = vsel %vm677, %v1447, %v1448
      %v1450 = vrot.slane %v1448, 4
      %v1451 = vrot.slane %v1385, 6
      %v1452 = vsel %vm677, %v1450, %v1451
      %v1453 = vrot.slane %v1386, 6
      %v1454 = vrot.slane %v1453, 4
      %v1455 = vrot.slane %v1124, 6
      %v1456 = vsel %vm677, %v1454, %v1455
      %v1457 = vrot.slane %v1455, 4
      %v1458 = vrot.slane %v1387, 6
      %v1459 = vsel %vm677, %v1457, %v1458
      %s1460 = scalar_lea.vmem %s1, 10
      %v1461 = vld [vmem:[%s1460] sm:$0x3]
      %v1462 = vunpack.c.l.b16 %v1407
      %v1463 = vunpack.c.l.b16 %v1410
      %v1464 = vunpack.c.l.b16 %v1414
      %v1465 = vunpack.c.l.b16 %v1417
      %v1466 = vunpack.c.l.b16 %v1421
      %v1467 = vunpack.c.l.b16 %v1424
      %v1468 = vunpack.c.l.b16 %v1428
      %v1469 = vunpack.c.l.b16 %v1431
      %v1470 = vunpack.c.l.b16 %v1435
      %v1471 = vunpack.c.l.b16 %v1438
      %v1472 = vunpack.c.l.b16 %v1442
      %v1473 = vunpack.c.l.b16 %v1445
      %v1474 = vunpack.c.l.b16 %v1449
      %v1475 = vunpack.c.l.b16 %v1452
      %v1476 = vunpack.c.l.b16 %v1456
      %v1477 = vunpack.c.l.b16 %v1459
      %v1478 = vpack.c.b16 %v1463, %v1462
      %v1479 = vpack.c.b16 %v1465, %v1464
      %v1480 = vpack.c.b16 %v1467, %v1466
      %v1481 = vpack.c.b16 %v1469, %v1468
      %v1482 = vpack.c.b16 %v1471, %v1470
      %v1483 = vpack.c.b16 %v1473, %v1472
      %v1484 = vpack.c.b16 %v1475, %v1474
      %v1485 = vpack.c.b16 %v1477, %v1476
      %v1487 = vsel %vm361, %v1478, 0
      %v1490 = vsel %vm361, %v1479, 0
      %v1493 = vsel %vm361, %v1480, 0
      %v1496 = vsel %vm361, %v1481, 0
      %v1499 = vsel %vm361, %v1482, 0
      %v1502 = vsel %vm361, %v1483, 0
      %v1505 = vsel %vm361, %v1484, 0
      %v1508 = vsel %vm361, %v1485, 0
      %v1511 = vsel %vm386, %v1461, 0
      %1513 = vmatprep.subr.bf16.mxu0 0
      %1514 = vmatpush1.bf16.msra.mxu0 0
      %1515 = vmatprep.subr.bf16.mxu0 0
      %1516 = vmatpush1.bf16.msra.mxu0 0
      %1517 = vmatprep.subr.bf16.mxu0 0
      %1518 = vmatpush1.bf16.msra.mxu0 0
      %1519 = vmatprep.subr.bf16.mxu0 0
      %1520 = vmatpush1.bf16.msra.mxu0 0
      %1521 = vmatprep.subr.bf16.mxu0 0
      %1522 = vmatpush1.bf16.msra.mxu0 0
      %1523 = vmatprep.subr.bf16.mxu0 0
      %1524 = vmatpush1.bf16.msra.mxu0 0
      %1525 = vmatprep.subr.bf16.mxu0 0
      %1526 = vmatpush1.bf16.msra.mxu0 0
      %1527 = vmatprep.subr.bf16.mxu0 0
      %1528 = vmatpush1.bf16.msra.mxu0 %v1511
      %1529 = vmatprep.subr.bf16.mxu0 0
      %1530 = vmatpush2.bf16.msra.mxu0 0
      %1531 = vmatprep.subr.bf16.mxu0 0
      %1532 = vmatpush2.bf16.msra.mxu0 0
      %1533 = vmatprep.subr.bf16.mxu0 0
      %1534 = vmatpush2.bf16.msra.mxu0 0
      %1535 = vmatprep.subr.bf16.mxu0 0
      %1536 = vmatpush2.bf16.msra.mxu0 0
      %1537 = vmatprep.subr.bf16.mxu0 0
      %1538 = vmatpush2.bf16.msra.mxu0 0
      %1539 = vmatprep.subr.bf16.mxu0 0
      %1540 = vmatpush2.bf16.msra.mxu0 0
      %1541 = vmatprep.subr.bf16.mxu0 0
      %1542 = vmatpush2.bf16.msra.mxu0 0
      %1543 = vmatprep.subr.bf16.mxu0 0
      %1544 = vmatpush2.bf16.msra.mxu0 0
      %1545 = vmatprep.mubr.bf16.mxu0 0
      %1546 = vmatmul.mubr.bf16.gmra.mxu0 %v1487
      %v1547 = vpop.f32.mrf.mxu0
      %v1548 = vadd.f32 0.0, %v1547
      %v1549 = vpop.f32.mrf.mxu0
      %v1550 = vpop.f32.mrf.mxu0
      %v1551 = vadd.f32 0.0, %v1550
      %v1552 = vpop.f32.mrf.mxu0
      %1553 = vmatprep.mubr.bf16.mxu0 0
      %1554 = vmatmul.mubr.bf16.gmra.mxu0 %v1490
      %v1555 = vpop.f32.mrf.mxu0
      %v1556 = vadd.f32 0.0, %v1555
      %v1557 = vpop.f32.mrf.mxu0
      %v1558 = vpop.f32.mrf.mxu0
      %v1559 = vadd.f32 0.0, %v1558
      %v1560 = vpop.f32.mrf.mxu0
      %1561 = vmatprep.mubr.bf16.mxu0 0
      %1562 = vmatmul.mubr.bf16.gmra.mxu0 %v1493
      %v1563 = vpop.f32.mrf.mxu0
      %v1564 = vadd.f32 0.0, %v1563
      %v1565 = vpop.f32.mrf.mxu0
      %v1566 = vpop.f32.mrf.mxu0
      %v1567 = vadd.f32 0.0, %v1566
      %v1568 = vpop.f32.mrf.mxu0
      %1569 = vmatprep.mubr.bf16.mxu0 0
      %1570 = vmatmul.mubr.bf16.gmra.mxu0 %v1496
      %v1571 = vpop.f32.mrf.mxu0
      %v1572 = vadd.f32 0.0, %v1571
      %v1573 = vpop.f32.mrf.mxu0
      %v1574 = vpop.f32.mrf.mxu0
      %v1575 = vadd.f32 0.0, %v1574
      %v1576 = vpop.f32.mrf.mxu0
      %1577 = vmatprep.mubr.bf16.mxu0 0
      %1578 = vmatmul.mubr.bf16.gmra.mxu0 %v1499
      %v1579 = vpop.f32.mrf.mxu0
      %v1580 = vadd.f32 0.0, %v1579
      %v1581 = vpop.f32.mrf.mxu0
      %v1582 = vpop.f32.mrf.mxu0
      %v1583 = vadd.f32 0.0, %v1582
      %v1584 = vpop.f32.mrf.mxu0
      %1585 = vmatprep.mubr.bf16.mxu0 0
      %1586 = vmatmul.mubr.bf16.gmra.mxu0 %v1502
      %v1587 = vpop.f32.mrf.mxu0
      %v1588 = vadd.f32 0.0, %v1587
      %v1589 = vpop.f32.mrf.mxu0
      %v1590 = vpop.f32.mrf.mxu0
      %v1591 = vadd.f32 0.0, %v1590
      %v1592 = vpop.f32.mrf.mxu0
      %1593 = vmatprep.mubr.bf16.mxu0 0
      %1594 = vmatmul.mubr.bf16.gmra.mxu0 %v1505
      %v1595 = vpop.f32.mrf.mxu0
      %v1596 = vadd.f32 0.0, %v1595
      %v1597 = vpop.f32.mrf.mxu0
      %v1598 = vpop.f32.mrf.mxu0
      %v1599 = vadd.f32 0.0, %v1598
      %v1600 = vpop.f32.mrf.mxu0
      %1601 = vmatprep.mubr.bf16.mxu0 0
      %1602 = vmatmul.mubr.bf16.gmra.mxu0 %v1508
      %v1603 = vpop.f32.mrf.mxu0
      %v1604 = vadd.f32 0.0, %v1603
      %v1605 = vpop.f32.mrf.mxu0
      %v1606 = vpop.f32.mrf.mxu0
      %v1607 = vadd.f32 0.0, %v1606
      %v1608 = vpop.f32.mrf.mxu0
      %1609 = vdwg.mxu0
      %v1610 = vadd.f32 %v1356, %v1548
      %v1611 = vadd.f32 %v1357, %v1551
      %v1612 = vadd.f32 %v1358, %v1556
      %v1613 = vadd.f32 %v1359, %v1559
      %v1614 = vadd.f32 %v1360, %v1564
      %v1615 = vadd.f32 %v1361, %v1567
      %v1616 = vadd.f32 %v1362, %v1572
      %v1617 = vadd.f32 %v1363, %v1575
      %v1618 = vadd.f32 %v1364, %v1580
      %v1619 = vadd.f32 %v1365, %v1583
      %v1620 = vadd.f32 %v1366, %v1588
      %v1621 = vadd.f32 %v1367, %v1591
      %v1622 = vadd.f32 %v1368, %v1596
      %v1623 = vadd.f32 %v1369, %v1599
      %v1624 = vadd.f32 %v1370, %v1604
      %v1625 = vadd.f32 %v1371, %v1607
      %s1626 = sadd.s32 %s215, 4
      %s1627 = smul.u32 %s1626, 3
      %s1628 = smul.addr %s1627, 4
      %s1629 = scalar_lea.vmem %s196, %s1628
      %v1630 = vld [vmem:[%s1629] sm:$0xf]
      %v1631 = vld [vmem:[%s1629 + $0x4] sm:$0xf]
      %v1632 = vld [vmem:[%s1629 + $0xc] sm:$0xf]
      %v1633 = vld [vmem:[%s1629 + $0x10] sm:$0xf]
      %v1634 = vld [vmem:[%s1629 + $0x18] sm:$0xf]
      %v1635 = vld [vmem:[%s1629 + $0x1c] sm:$0xf]
      %v1636 = vld [vmem:[%s1629 + $0x24] sm:$0xf]
      %v1637 = vld [vmem:[%s1629 + $0x28] sm:$0xf]
      %v1638 = vld [vmem:[%s1629 + $0x30] sm:$0xf]
      %v1639 = vld [vmem:[%s1629 + $0x34] sm:$0xf]
      %v1640 = vld [vmem:[%s1629 + $0x3c] sm:$0xf]
      %v1641 = vld [vmem:[%s1629 + $0x40] sm:$0xf]
      %v1642 = vld [vmem:[%s1629 + $0x48] sm:$0xf]
      %v1643 = vld [vmem:[%s1629 + $0x4c] sm:$0xf]
      %v1644 = vld [vmem:[%s1629 + $0x54] sm:$0xf]
      %v1645 = vld [vmem:[%s1629 + $0x58] sm:$0xf]
      %s1646 = scalar_lea.vmem %s1, 12
      %v1647 = vld [vmem:[%s1646] sm:$0x3]
      %v1664 = vunpack.c.l.b16 %v1630
      %v1665 = vunpack.c.l.b16 %v1631
      %v1666 = vunpack.c.l.b16 %v1632
      %v1667 = vunpack.c.l.b16 %v1633
      %v1668 = vunpack.c.l.b16 %v1634
      %v1669 = vunpack.c.l.b16 %v1635
      %v1670 = vunpack.c.l.b16 %v1636
      %v1671 = vunpack.c.l.b16 %v1637
      %v1672 = vunpack.c.l.b16 %v1638
      %v1673 = vunpack.c.l.b16 %v1639
      %v1674 = vunpack.c.l.b16 %v1640
      %v1675 = vunpack.c.l.b16 %v1641
      %v1676 = vunpack.c.l.b16 %v1642
      %v1677 = vunpack.c.l.b16 %v1643
      %v1678 = vunpack.c.l.b16 %v1644
      %v1679 = vunpack.c.l.b16 %v1645
      %v1680 = vpack.c.b16 %v1665, %v1664
      %v1681 = vpack.c.b16 %v1667, %v1666
      %v1682 = vpack.c.b16 %v1669, %v1668
      %v1683 = vpack.c.b16 %v1671, %v1670
      %v1684 = vpack.c.b16 %v1673, %v1672
      %v1685 = vpack.c.b16 %v1675, %v1674
      %v1686 = vpack.c.b16 %v1677, %v1676
      %v1687 = vpack.c.b16 %v1679, %v1678
      %v1689 = vsel %vm361, %v1680, 0
      %v1692 = vsel %vm361, %v1681, 0
      %v1695 = vsel %vm361, %v1682, 0
      %v1698 = vsel %vm361, %v1683, 0
      %v1701 = vsel %vm361, %v1684, 0
      %v1704 = vsel %vm361, %v1685, 0
      %v1707 = vsel %vm361, %v1686, 0
      %v1710 = vsel %vm361, %v1687, 0
      %v1713 = vsel %vm386, %v1647, 0
      %1715 = vmatprep.subr.bf16.mxu0 0
      %1716 = vmatpush1.bf16.msra.mxu0 0
      %1717 = vmatprep.subr.bf16.mxu0 0
      %1718 = vmatpush1.bf16.msra.mxu0 0
      %1719 = vmatprep.subr.bf16.mxu0 0
      %1720 = vmatpush1.bf16.msra.mxu0 0
      %1721 = vmatprep.subr.bf16.mxu0 0
      %1722 = vmatpush1.bf16.msra.mxu0 0
      %1723 = vmatprep.subr.bf16.mxu0 0
      %1724 = vmatpush1.bf16.msra.mxu0 0
      %1725 = vmatprep.subr.bf16.mxu0 0
      %1726 = vmatpush1.bf16.msra.mxu0 0
      %1727 = vmatprep.subr.bf16.mxu0 0
      %1728 = vmatpush1.bf16.msra.mxu0 0
      %1729 = vmatprep.subr.bf16.mxu0 0
      %1730 = vmatpush1.bf16.msra.mxu0 %v1713
      %1731 = vmatprep.subr.bf16.mxu0 0
      %1732 = vmatpush2.bf16.msra.mxu0 0
      %1733 = vmatprep.subr.bf16.mxu0 0
      %1734 = vmatpush2.bf16.msra.mxu0 0
      %1735 = vmatprep.subr.bf16.mxu0 0
      %1736 = vmatpush2.bf16.msra.mxu0 0
      %1737 = vmatprep.subr.bf16.mxu0 0
      %1738 = vmatpush2.bf16.msra.mxu0 0
      %1739 = vmatprep.subr.bf16.mxu0 0
      %1740 = vmatpush2.bf16.msra.mxu0 0
      %1741 = vmatprep.subr.bf16.mxu0 0
      %1742 = vmatpush2.bf16.msra.mxu0 0
      %1743 = vmatprep.subr.bf16.mxu0 0
      %1744 = vmatpush2.bf16.msra.mxu0 0
      %1745 = vmatprep.subr.bf16.mxu0 0
      %1746 = vmatpush2.bf16.msra.mxu0 0
      %1747 = vmatprep.mubr.bf16.mxu0 0
      %1748 = vmatmul.mubr.bf16.gmra.mxu0 %v1689
      %v1749 = vpop.f32.mrf.mxu0
      %v1750 = vadd.f32 0.0, %v1749
      %v1751 = vpop.f32.mrf.mxu0
      %v1752 = vpop.f32.mrf.mxu0
      %v1753 = vadd.f32 0.0, %v1752
      %v1754 = vpop.f32.mrf.mxu0
      %1755 = vmatprep.mubr.bf16.mxu0 0
      %1756 = vmatmul.mubr.bf16.gmra.mxu0 %v1692
      %v1757 = vpop.f32.mrf.mxu0
      %v1758 = vadd.f32 0.0, %v1757
      %v1759 = vpop.f32.mrf.mxu0
      %v1760 = vpop.f32.mrf.mxu0
      %v1761 = vadd.f32 0.0, %v1760
      %v1762 = vpop.f32.mrf.mxu0
      %1763 = vmatprep.mubr.bf16.mxu0 0
      %1764 = vmatmul.mubr.bf16.gmra.mxu0 %v1695
      %v1765 = vpop.f32.mrf.mxu0
      %v1766 = vadd.f32 0.0, %v1765
      %v1767 = vpop.f32.mrf.mxu0
      %v1768 = vpop.f32.mrf.mxu0
      %v1769 = vadd.f32 0.0, %v1768
      %v1770 = vpop.f32.mrf.mxu0
      %1771 = vmatprep.mubr.bf16.mxu0 0
      %1772 = vmatmul.mubr.bf16.gmra.mxu0 %v1698
      %v1773 = vpop.f32.mrf.mxu0
      %v1774 = vadd.f32 0.0, %v1773
      %v1775 = vpop.f32.mrf.mxu0
      %v1776 = vpop.f32.mrf.mxu0
      %v1777 = vadd.f32 0.0, %v1776
      %v1778 = vpop.f32.mrf.mxu0
      %1779 = vmatprep.mubr.bf16.mxu0 0
      %1780 = vmatmul.mubr.bf16.gmra.mxu0 %v1701
      %v1781 = vpop.f32.mrf.mxu0
      %v1782 = vadd.f32 0.0, %v1781
      %v1783 = vpop.f32.mrf.mxu0
      %v1784 = vpop.f32.mrf.mxu0
      %v1785 = vadd.f32 0.0, %v1784
      %v1786 = vpop.f32.mrf.mxu0
      %1787 = vmatprep.mubr.bf16.mxu0 0
      %1788 = vmatmul.mubr.bf16.gmra.mxu0 %v1704
      %v1789 = vpop.f32.mrf.mxu0
      %v1790 = vadd.f32 0.0, %v1789
      %v1791 = vpop.f32.mrf.mxu0
      %v1792 = vpop.f32.mrf.mxu0
      %v1793 = vadd.f32 0.0, %v1792
      %v1794 = vpop.f32.mrf.mxu0
      %1795 = vmatprep.mubr.bf16.mxu0 0
      %1796 = vmatmul.mubr.bf16.gmra.mxu0 %v1707
      %v1797 = vpop.f32.mrf.mxu0
      %v1798 = vadd.f32 0.0, %v1797
      %v1799 = vpop.f32.mrf.mxu0
      %v1800 = vpop.f32.mrf.mxu0
      %v1801 = vadd.f32 0.0, %v1800
      %v1802 = vpop.f32.mrf.mxu0
      %1803 = vmatprep.mubr.bf16.mxu0 0
      %1804 = vmatmul.mubr.bf16.gmra.mxu0 %v1710
      %v1805 = vpop.f32.mrf.mxu0
      %v1806 = vadd.f32 0.0, %v1805
      %v1807 = vpop.f32.mrf.mxu0
      %v1808 = vpop.f32.mrf.mxu0
      %v1809 = vadd.f32 0.0, %v1808
      %v1810 = vpop.f32.mrf.mxu0
      %1811 = vdwg.mxu0
      %v1812 = vadd.f32 %v1610, %v1750
      %v1813 = vadd.f32 %v1611, %v1753
      %v1814 = vadd.f32 %v1612, %v1758
      %v1815 = vadd.f32 %v1613, %v1761
      %v1816 = vadd.f32 %v1614, %v1766
      %v1817 = vadd.f32 %v1615, %v1769
      %v1818 = vadd.f32 %v1616, %v1774
      %v1819 = vadd.f32 %v1617, %v1777
      %v1820 = vadd.f32 %v1618, %v1782
      %v1821 = vadd.f32 %v1619, %v1785
      %v1822 = vadd.f32 %v1620, %v1790
      %v1823 = vadd.f32 %v1621, %v1793
      %v1824 = vadd.f32 %v1622, %v1798
      %v1825 = vadd.f32 %v1623, %v1801
      %v1826 = vadd.f32 %v1624, %v1806
      %v1827 = vadd.f32 %v1625, %v1809
      %v1828 = vld [vmem:[%s1629] sm:$0xe]
      %v1829 = vld [vmem:[%s1629 + $0x4] sm:$0xf]
      %v1830 = vld [vmem:[%s1629 + $0x8] sm:$0x1]
      %v1831 = vld [vmem:[%s1629 + $0xc] sm:$0xe]
      %v1832 = vld [vmem:[%s1629 + $0x10] sm:$0xf]
      %v1833 = vld [vmem:[%s1629 + $0x14] sm:$0x1]
      %v1834 = vld [vmem:[%s1629 + $0x18] sm:$0xe]
      %v1835 = vld [vmem:[%s1629 + $0x1c] sm:$0xf]
      %v1836 = vld [vmem:[%s1629 + $0x20] sm:$0x1]
      %v1837 = vld [vmem:[%s1629 + $0x24] sm:$0xe]
      %v1838 = vld [vmem:[%s1629 + $0x28] sm:$0xf]
      %v1839 = vld [vmem:[%s1629 + $0x2c] sm:$0x1]
      %v1840 = vld [vmem:[%s1629 + $0x30] sm:$0xe]
      %v1841 = vld [vmem:[%s1629 + $0x34] sm:$0xf]
      %v1842 = vld [vmem:[%s1629 + $0x38] sm:$0x1]
      %v1843 = vld [vmem:[%s1629 + $0x3c] sm:$0xe]
      %v1844 = vld [vmem:[%s1629 + $0x40] sm:$0xf]
      %v1845 = vld [vmem:[%s1629 + $0x44] sm:$0x1]
      %v1846 = vld [vmem:[%s1629 + $0x48] sm:$0xe]
      %v1847 = vld [vmem:[%s1629 + $0x4c] sm:$0xf]
      %v1848 = vld [vmem:[%s1629 + $0x50] sm:$0x1]
      %v1849 = vld [vmem:[%s1629 + $0x54] sm:$0xe]
      %v1850 = vld [vmem:[%s1629 + $0x58] sm:$0xf]
      %v1851 = vld [vmem:[%s1629 + $0x5c] sm:$0x1]
      %v1876 = vrot.slane %v1828, 5
      %v1877 = vrot.slane %v1876, 4
      %v1878 = vrot.slane %v1829, 5
      %v1879 = vsel %vm278, %v1877, %v1878
      %v1880 = vrot.slane %v1878, 4
      %v1881 = vrot.slane %v1830, 5
      %v1882 = vsel %vm278, %v1880, %v1881
      %v1883 = vrot.slane %v1831, 5
      %v1884 = vrot.slane %v1883, 4
      %v1885 = vrot.slane %v1832, 5
      %v1886 = vsel %vm278, %v1884, %v1885
      %v1887 = vrot.slane %v1885, 4
      %v1888 = vrot.slane %v1833, 5
      %v1889 = vsel %vm278, %v1887, %v1888
      %v1890 = vrot.slane %v1834, 5
      %v1891 = vrot.slane %v1890, 4
      %v1892 = vrot.slane %v1835, 5
      %v1893 = vsel %vm278, %v1891, %v1892
      %v1894 = vrot.slane %v1892, 4
      %v1895 = vrot.slane %v1836, 5
      %v1896 = vsel %vm278, %v1894, %v1895
      %v1897 = vrot.slane %v1837, 5
      %v1898 = vrot.slane %v1897, 4
      %v1899 = vrot.slane %v1838, 5
      %v1900 = vsel %vm278, %v1898, %v1899
      %v1901 = vrot.slane %v1899, 4
      %v1902 = vrot.slane %v1839, 5
      %v1903 = vsel %vm278, %v1901, %v1902
      %v1904 = vrot.slane %v1840, 5
      %v1905 = vrot.slane %v1904, 4
      %v1906 = vrot.slane %v1841, 5
      %v1907 = vsel %vm278, %v1905, %v1906
      %v1908 = vrot.slane %v1906, 4
      %v1909 = vrot.slane %v1842, 5
      %v1910 = vsel %vm278, %v1908, %v1909
      %v1911 = vrot.slane %v1843, 5
      %v1912 = vrot.slane %v1911, 4
      %v1913 = vrot.slane %v1844, 5
      %v1914 = vsel %vm278, %v1912, %v1913
      %v1915 = vrot.slane %v1913, 4
      %v1916 = vrot.slane %v1845, 5
      %v1917 = vsel %vm278, %v1915, %v1916
      %v1918 = vrot.slane %v1846, 5
      %v1919 = vrot.slane %v1918, 4
      %v1920 = vrot.slane %v1847, 5
      %v1921 = vsel %vm278, %v1919, %v1920
      %v1922 = vrot.slane %v1920, 4
      %v1923 = vrot.slane %v1848, 5
      %v1924 = vsel %vm278, %v1922, %v1923
      %v1925 = vrot.slane %v1849, 5
      %v1926 = vrot.slane %v1925, 4
      %v1927 = vrot.slane %v1850, 5
      %v1928 = vsel %vm278, %v1926, %v1927
      %v1929 = vrot.slane %v1927, 4
      %v1930 = vrot.slane %v1851, 5
      %v1931 = vsel %vm278, %v1929, %v1930
      %s1932 = scalar_lea.vmem %s1, 14
      %v1933 = vld [vmem:[%s1932] sm:$0x3]
      %v1934 = vunpack.c.l.b16 %v1879
      %v1935 = vunpack.c.l.b16 %v1882
      %v1936 = vunpack.c.l.b16 %v1886
      %v1937 = vunpack.c.l.b16 %v1889
      %v1938 = vunpack.c.l.b16 %v1893
      %v1939 = vunpack.c.l.b16 %v1896
      %v1940 = vunpack.c.l.b16 %v1900
      %v1941 = vunpack.c.l.b16 %v1903
      %v1942 = vunpack.c.l.b16 %v1907
      %v1943 = vunpack.c.l.b16 %v1910
      %v1944 = vunpack.c.l.b16 %v1914
      %v1945 = vunpack.c.l.b16 %v1917
      %v1946 = vunpack.c.l.b16 %v1921
      %v1947 = vunpack.c.l.b16 %v1924
      %v1948 = vunpack.c.l.b16 %v1928
      %v1949 = vunpack.c.l.b16 %v1931
      %v1950 = vpack.c.b16 %v1935, %v1934
      %v1951 = vpack.c.b16 %v1937, %v1936
      %v1952 = vpack.c.b16 %v1939, %v1938
      %v1953 = vpack.c.b16 %v1941, %v1940
      %v1954 = vpack.c.b16 %v1943, %v1942
      %v1955 = vpack.c.b16 %v1945, %v1944
      %v1956 = vpack.c.b16 %v1947, %v1946
      %v1957 = vpack.c.b16 %v1949, %v1948
      %v1959 = vsel %vm361, %v1950, 0
      %v1962 = vsel %vm361, %v1951, 0
      %v1965 = vsel %vm361, %v1952, 0
      %v1968 = vsel %vm361, %v1953, 0
      %v1971 = vsel %vm361, %v1954, 0
      %v1974 = vsel %vm361, %v1955, 0
      %v1977 = vsel %vm361, %v1956, 0
      %v1980 = vsel %vm361, %v1957, 0
      %v1983 = vsel %vm386, %v1933, 0
      %1985 = vmatprep.subr.bf16.mxu0 0
      %1986 = vmatpush1.bf16.msra.mxu0 0
      %1987 = vmatprep.subr.bf16.mxu0 0
      %1988 = vmatpush1.bf16.msra.mxu0 0
      %1989 = vmatprep.subr.bf16.mxu0 0
      %1990 = vmatpush1.bf16.msra.mxu0 0
      %1991 = vmatprep.subr.bf16.mxu0 0
      %1992 = vmatpush1.bf16.msra.mxu0 0
      %1993 = vmatprep.subr.bf16.mxu0 0
      %1994 = vmatpush1.bf16.msra.mxu0 0
      %1995 = vmatprep.subr.bf16.mxu0 0
      %1996 = vmatpush1.bf16.msra.mxu0 0
      %1997 = vmatprep.subr.bf16.mxu0 0
      %1998 = vmatpush1.bf16.msra.mxu0 0
      %1999 = vmatprep.subr.bf16.mxu0 0
      %2000 = vmatpush1.bf16.msra.mxu0 %v1983
      %2001 = vmatprep.subr.bf16.mxu0 0
      %2002 = vmatpush2.bf16.msra.mxu0 0
      %2003 = vmatprep.subr.bf16.mxu0 0
      %2004 = vmatpush2.bf16.msra.mxu0 0
      %2005 = vmatprep.subr.bf16.mxu0 0
      %2006 = vmatpush2.bf16.msra.mxu0 0
      %2007 = vmatprep.subr.bf16.mxu0 0
      %2008 = vmatpush2.bf16.msra.mxu0 0
      %2009 = vmatprep.subr.bf16.mxu0 0
      %2010 = vmatpush2.bf16.msra.mxu0 0
      %2011 = vmatprep.subr.bf16.mxu0 0
      %2012 = vmatpush2.bf16.msra.mxu0 0
      %2013 = vmatprep.subr.bf16.mxu0 0
      %2014 = vmatpush2.bf16.msra.mxu0 0
      %2015 = vmatprep.subr.bf16.mxu0 0
      %2016 = vmatpush2.bf16.msra.mxu0 0
      %2017 = vmatprep.mubr.bf16.mxu0 0
      %2018 = vmatmul.mubr.bf16.gmra.mxu0 %v1959
      %v2019 = vpop.f32.mrf.mxu0
      %v2020 = vadd.f32 0.0, %v2019
      %v2021 = vpop.f32.mrf.mxu0
      %v2022 = vpop.f32.mrf.mxu0
      %v2023 = vadd.f32 0.0, %v2022
      %v2024 = vpop.f32.mrf.mxu0
      %2025 = vmatprep.mubr.bf16.mxu0 0
      %2026 = vmatmul.mubr.bf16.gmra.mxu0 %v1962
      %v2027 = vpop.f32.mrf.mxu0
      %v2028 = vadd.f32 0.0, %v2027
      %v2029 = vpop.f32.mrf.mxu0
      %v2030 = vpop.f32.mrf.mxu0
      %v2031 = vadd.f32 0.0, %v2030
      %v2032 = vpop.f32.mrf.mxu0
      %2033 = vmatprep.mubr.bf16.mxu0 0
      %2034 = vmatmul.mubr.bf16.gmra.mxu0 %v1965
      %v2035 = vpop.f32.mrf.mxu0
      %v2036 = vadd.f32 0.0, %v2035
      %v2037 = vpop.f32.mrf.mxu0
      %v2038 = vpop.f32.mrf.mxu0
      %v2039 = vadd.f32 0.0, %v2038
      %v2040 = vpop.f32.mrf.mxu0
      %2041 = vmatprep.mubr.bf16.mxu0 0
      %2042 = vmatmul.mubr.bf16.gmra.mxu0 %v1968
      %v2043 = vpop.f32.mrf.mxu0
      %v2044 = vadd.f32 0.0, %v2043
      %v2045 = vpop.f32.mrf.mxu0
      %v2046 = vpop.f32.mrf.mxu0
      %v2047 = vadd.f32 0.0, %v2046
      %v2048 = vpop.f32.mrf.mxu0
      %2049 = vmatprep.mubr.bf16.mxu0 0
      %2050 = vmatmul.mubr.bf16.gmra.mxu0 %v1971
      %v2051 = vpop.f32.mrf.mxu0
      %v2052 = vadd.f32 0.0, %v2051
      %v2053 = vpop.f32.mrf.mxu0
      %v2054 = vpop.f32.mrf.mxu0
      %v2055 = vadd.f32 0.0, %v2054
      %v2056 = vpop.f32.mrf.mxu0
      %2057 = vmatprep.mubr.bf16.mxu0 0
      %2058 = vmatmul.mubr.bf16.gmra.mxu0 %v1974
      %v2059 = vpop.f32.mrf.mxu0
      %v2060 = vadd.f32 0.0, %v2059
      %v2061 = vpop.f32.mrf.mxu0
      %v2062 = vpop.f32.mrf.mxu0
      %v2063 = vadd.f32 0.0, %v2062
      %v2064 = vpop.f32.mrf.mxu0
      %2065 = vmatprep.mubr.bf16.mxu0 0
      %2066 = vmatmul.mubr.bf16.gmra.mxu0 %v1977
      %v2067 = vpop.f32.mrf.mxu0
      %v2068 = vadd.f32 0.0, %v2067
      %v2069 = vpop.f32.mrf.mxu0
      %v2070 = vpop.f32.mrf.mxu0
      %v2071 = vadd.f32 0.0, %v2070
      %v2072 = vpop.f32.mrf.mxu0
      %2073 = vmatprep.mubr.bf16.mxu0 0
      %2074 = vmatmul.mubr.bf16.gmra.mxu0 %v1980
      %v2075 = vpop.f32.mrf.mxu0
      %v2076 = vadd.f32 0.0, %v2075
      %v2077 = vpop.f32.mrf.mxu0
      %v2078 = vpop.f32.mrf.mxu0
      %v2079 = vadd.f32 0.0, %v2078
      %v2080 = vpop.f32.mrf.mxu0
      %2081 = vdwg.mxu0
      %v2082 = vadd.f32 %v1812, %v2020
      %v2083 = vadd.f32 %v1813, %v2023
      %v2084 = vadd.f32 %v1814, %v2028
      %v2085 = vadd.f32 %v1815, %v2031
      %v2086 = vadd.f32 %v1816, %v2036
      %v2087 = vadd.f32 %v1817, %v2039
      %v2088 = vadd.f32 %v1818, %v2044
      %v2089 = vadd.f32 %v1819, %v2047
      %v2090 = vadd.f32 %v1820, %v2052
      %v2091 = vadd.f32 %v1821, %v2055
      %v2092 = vadd.f32 %v1822, %v2060
      %v2093 = vadd.f32 %v1823, %v2063
      %v2094 = vadd.f32 %v1824, %v2068
      %v2095 = vadd.f32 %v1825, %v2071
      %v2096 = vadd.f32 %v1826, %v2076
      %v2097 = vadd.f32 %v1827, %v2079
      %v2098 = vld [vmem:[%s1629] sm:$0xc]
      %v2099 = vld [vmem:[%s1629 + $0x8] sm:$0x3]
      %v2100 = vld [vmem:[%s1629 + $0xc] sm:$0xc]
      %v2101 = vld [vmem:[%s1629 + $0x14] sm:$0x3]
      %v2102 = vld [vmem:[%s1629 + $0x18] sm:$0xc]
      %v2103 = vld [vmem:[%s1629 + $0x20] sm:$0x3]
      %v2104 = vld [vmem:[%s1629 + $0x24] sm:$0xc]
      %v2105 = vld [vmem:[%s1629 + $0x2c] sm:$0x3]
      %v2106 = vld [vmem:[%s1629 + $0x30] sm:$0xc]
      %v2107 = vld [vmem:[%s1629 + $0x38] sm:$0x3]
      %v2108 = vld [vmem:[%s1629 + $0x3c] sm:$0xc]
      %v2109 = vld [vmem:[%s1629 + $0x44] sm:$0x3]
      %v2110 = vld [vmem:[%s1629 + $0x48] sm:$0xc]
      %v2111 = vld [vmem:[%s1629 + $0x50] sm:$0x3]
      %v2112 = vld [vmem:[%s1629 + $0x54] sm:$0xc]
      %v2113 = vld [vmem:[%s1629 + $0x5c] sm:$0x3]
      %v2130 = vrot.slane %v2098, 6
      %v2131 = vrot.slane %v2130, 4
      %v2132 = vrot.slane %v1829, 6
      %v2133 = vsel %vm677, %v2131, %v2132
      %v2134 = vrot.slane %v2132, 4
      %v2135 = vrot.slane %v2099, 6
      %v2136 = vsel %vm677, %v2134, %v2135
      %v2137 = vrot.slane %v2100, 6
      %v2138 = vrot.slane %v2137, 4
      %v2139 = vrot.slane %v1832, 6
      %v2140 = vsel %vm677, %v2138, %v2139
      %v2141 = vrot.slane %v2139, 4
      %v2142 = vrot.slane %v2101, 6
      %v2143 = vsel %vm677, %v2141, %v2142
      %v2144 = vrot.slane %v2102, 6
      %v2145 = vrot.slane %v2144, 4
      %v2146 = vrot.slane %v1835, 6
      %v2147 = vsel %vm677, %v2145, %v2146
      %v2148 = vrot.slane %v2146, 4
      %v2149 = vrot.slane %v2103, 6
      %v2150 = vsel %vm677, %v2148, %v2149
      %v2151 = vrot.slane %v2104, 6
      %v2152 = vrot.slane %v2151, 4
      %v2153 = vrot.slane %v1838, 6
      %v2154 = vsel %vm677, %v2152, %v2153
      %v2155 = vrot.slane %v2153, 4
      %v2156 = vrot.slane %v2105, 6
      %v2157 = vsel %vm677, %v2155, %v2156
      %v2158 = vrot.slane %v2106, 6
      %v2159 = vrot.slane %v2158, 4
      %v2160 = vrot.slane %v1841, 6
      %v2161 = vsel %vm677, %v2159, %v2160
      %v2162 = vrot.slane %v2160, 4
      %v2163 = vrot.slane %v2107, 6
      %v2164 = vsel %vm677, %v2162, %v2163
      %v2165 = vrot.slane %v2108, 6
      %v2166 = vrot.slane %v2165, 4
      %v2167 = vrot.slane %v1844, 6
      %v2168 = vsel %vm677, %v2166, %v2167
      %v2169 = vrot.slane %v2167, 4
      %v2170 = vrot.slane %v2109, 6
      %v2171 = vsel %vm677, %v2169, %v2170
      %v2172 = vrot.slane %v2110, 6
      %v2173 = vrot.slane %v2172, 4
      %v2174 = vrot.slane %v1847, 6
      %v2175 = vsel %vm677, %v2173, %v2174
      %v2176 = vrot.slane %v2174, 4
      %v2177 = vrot.slane %v2111, 6
      %v2178 = vsel %vm677, %v2176, %v2177
      %v2179 = vrot.slane %v2112, 6
      %v2180 = vrot.slane %v2179, 4
      %v2181 = vrot.slane %v1850, 6
      %v2182 = vsel %vm677, %v2180, %v2181
      %v2183 = vrot.slane %v2181, 4
      %v2184 = vrot.slane %v2113, 6
      %v2185 = vsel %vm677, %v2183, %v2184
      %s2186 = scalar_lea.vmem %s1, 16
      %v2187 = vld [vmem:[%s2186] sm:$0x3]
      %v2188 = vunpack.c.l.b16 %v2133
      %v2189 = vunpack.c.l.b16 %v2136
      %v2190 = vunpack.c.l.b16 %v2140
      %v2191 = vunpack.c.l.b16 %v2143
      %v2192 = vunpack.c.l.b16 %v2147
      %v2193 = vunpack.c.l.b16 %v2150
      %v2194 = vunpack.c.l.b16 %v2154
      %v2195 = vunpack.c.l.b16 %v2157
      %v2196 = vunpack.c.l.b16 %v2161
      %v2197 = vunpack.c.l.b16 %v2164
      %v2198 = vunpack.c.l.b16 %v2168
      %v2199 = vunpack.c.l.b16 %v2171
      %v2200 = vunpack.c.l.b16 %v2175
      %v2201 = vunpack.c.l.b16 %v2178
      %v2202 = vunpack.c.l.b16 %v2182
      %v2203 = vunpack.c.l.b16 %v2185
      %v2204 = vpack.c.b16 %v2189, %v2188
      %v2205 = vpack.c.b16 %v2191, %v2190
      %v2206 = vpack.c.b16 %v2193, %v2192
      %v2207 = vpack.c.b16 %v2195, %v2194
      %v2208 = vpack.c.b16 %v2197, %v2196
      %v2209 = vpack.c.b16 %v2199, %v2198
      %v2210 = vpack.c.b16 %v2201, %v2200
      %v2211 = vpack.c.b16 %v2203, %v2202
      %v2213 = vsel %vm361, %v2204, 0
      %v2216 = vsel %vm361, %v2205, 0
      %v2219 = vsel %vm361, %v2206, 0
      %v2222 = vsel %vm361, %v2207, 0
      %v2225 = vsel %vm361, %v2208, 0
      %v2228 = vsel %vm361, %v2209, 0
      %v2231 = vsel %vm361, %v2210, 0
      %v2234 = vsel %vm361, %v2211, 0
      %v2237 = vsel %vm386, %v2187, 0
      %2239 = vmatprep.subr.bf16.mxu0 0
      %2240 = vmatpush1.bf16.msra.mxu0 0
      %2241 = vmatprep.subr.bf16.mxu0 0
      %2242 = vmatpush1.bf16.msra.mxu0 0
      %2243 = vmatprep.subr.bf16.mxu0 0
      %2244 = vmatpush1.bf16.msra.mxu0 0
      %2245 = vmatprep.subr.bf16.mxu0 0
      %2246 = vmatpush1.bf16.msra.mxu0 0
      %2247 = vmatprep.subr.bf16.mxu0 0
      %2248 = vmatpush1.bf16.msra.mxu0 0
      %2249 = vmatprep.subr.bf16.mxu0 0
      %2250 = vmatpush1.bf16.msra.mxu0 0
      %2251 = vmatprep.subr.bf16.mxu0 0
      %2252 = vmatpush1.bf16.msra.mxu0 0
      %2253 = vmatprep.subr.bf16.mxu0 0
      %2254 = vmatpush1.bf16.msra.mxu0 %v2237
      %2255 = vmatprep.subr.bf16.mxu0 0
      %2256 = vmatpush2.bf16.msra.mxu0 0
      %2257 = vmatprep.subr.bf16.mxu0 0
      %2258 = vmatpush2.bf16.msra.mxu0 0
      %2259 = vmatprep.subr.bf16.mxu0 0
      %2260 = vmatpush2.bf16.msra.mxu0 0
      %2261 = vmatprep.subr.bf16.mxu0 0
      %2262 = vmatpush2.bf16.msra.mxu0 0
      %2263 = vmatprep.subr.bf16.mxu0 0
      %2264 = vmatpush2.bf16.msra.mxu0 0
      %2265 = vmatprep.subr.bf16.mxu0 0
      %2266 = vmatpush2.bf16.msra.mxu0 0
      %2267 = vmatprep.subr.bf16.mxu0 0
      %2268 = vmatpush2.bf16.msra.mxu0 0
      %2269 = vmatprep.subr.bf16.mxu0 0
      %2270 = vmatpush2.bf16.msra.mxu0 0
      %2271 = vmatprep.mubr.bf16.mxu0 0
      %2272 = vmatmul.mubr.bf16.gmra.mxu0 %v2213
      %v2273 = vpop.f32.mrf.mxu0
      %v2274 = vadd.f32 0.0, %v2273
      %v2275 = vpop.f32.mrf.mxu0
      %v2276 = vpop.f32.mrf.mxu0
      %v2277 = vadd.f32 0.0, %v2276
      %v2278 = vpop.f32.mrf.mxu0
      %2279 = vmatprep.mubr.bf16.mxu0 0
      %2280 = vmatmul.mubr.bf16.gmra.mxu0 %v2216
      %v2281 = vpop.f32.mrf.mxu0
      %v2282 = vadd.f32 0.0, %v2281
      %v2283 = vpop.f32.mrf.mxu0
      %v2284 = vpop.f32.mrf.mxu0
      %v2285 = vadd.f32 0.0, %v2284
      %v2286 = vpop.f32.mrf.mxu0
      %2287 = vmatprep.mubr.bf16.mxu0 0
      %2288 = vmatmul.mubr.bf16.gmra.mxu0 %v2219
      %v2289 = vpop.f32.mrf.mxu0
      %v2290 = vadd.f32 0.0, %v2289
      %v2291 = vpop.f32.mrf.mxu0
      %v2292 = vpop.f32.mrf.mxu0
      %v2293 = vadd.f32 0.0, %v2292
      %v2294 = vpop.f32.mrf.mxu0
      %2295 = vmatprep.mubr.bf16.mxu0 0
      %2296 = vmatmul.mubr.bf16.gmra.mxu0 %v2222
      %v2297 = vpop.f32.mrf.mxu0
      %v2298 = vadd.f32 0.0, %v2297
      %v2299 = vpop.f32.mrf.mxu0
      %v2300 = vpop.f32.mrf.mxu0
      %v2301 = vadd.f32 0.0, %v2300
      %v2302 = vpop.f32.mrf.mxu0
      %2303 = vmatprep.mubr.bf16.mxu0 0
      %2304 = vmatmul.mubr.bf16.gmra.mxu0 %v2225
      %v2305 = vpop.f32.mrf.mxu0
      %v2306 = vadd.f32 0.0, %v2305
      %v2307 = vpop.f32.mrf.mxu0
      %v2308 = vpop.f32.mrf.mxu0
      %v2309 = vadd.f32 0.0, %v2308
      %v2310 = vpop.f32.mrf.mxu0
      %2311 = vmatprep.mubr.bf16.mxu0 0
      %2312 = vmatmul.mubr.bf16.gmra.mxu0 %v2228
      %v2313 = vpop.f32.mrf.mxu0
      %v2314 = vadd.f32 0.0, %v2313
      %v2315 = vpop.f32.mrf.mxu0
      %v2316 = vpop.f32.mrf.mxu0
      %v2317 = vadd.f32 0.0, %v2316
      %v2318 = vpop.f32.mrf.mxu0
      %2319 = vmatprep.mubr.bf16.mxu0 0
      %2320 = vmatmul.mubr.bf16.gmra.mxu0 %v2231
      %v2321 = vpop.f32.mrf.mxu0
      %v2322 = vadd.f32 0.0, %v2321
      %v2323 = vpop.f32.mrf.mxu0
      %v2324 = vpop.f32.mrf.mxu0
      %v2325 = vadd.f32 0.0, %v2324
      %v2326 = vpop.f32.mrf.mxu0
      %2327 = vmatprep.mubr.bf16.mxu0 0
      %2328 = vmatmul.mubr.bf16.gmra.mxu0 %v2234
      %v2329 = vpop.f32.mrf.mxu0
      %v2330 = vadd.f32 0.0, %v2329
      %v2331 = vpop.f32.mrf.mxu0
      %v2332 = vpop.f32.mrf.mxu0
      %v2333 = vadd.f32 0.0, %v2332
      %v2334 = vpop.f32.mrf.mxu0
      %2335 = vdwg.mxu0
      %v2336 = vadd.f32 %v2082, %v2274
      %v2337 = vadd.f32 %v2083, %v2277
      %v2338 = vadd.f32 %v2084, %v2282
      %v2339 = vadd.f32 %v2085, %v2285
      %v2340 = vadd.f32 %v2086, %v2290
      %v2341 = vadd.f32 %v2087, %v2293
      %v2342 = vadd.f32 %v2088, %v2298
      %v2343 = vadd.f32 %v2089, %v2301
      %v2344 = vadd.f32 %v2090, %v2306
      %v2345 = vadd.f32 %v2091, %v2309
      %v2346 = vadd.f32 %v2092, %v2314
      %v2347 = vadd.f32 %v2093, %v2317
      %v2348 = vadd.f32 %v2094, %v2322
      %v2349 = vadd.f32 %v2095, %v2325
      %v2350 = vadd.f32 %v2096, %v2330
      %v2351 = vadd.f32 %v2097, %v2333
      %v2352 = vpack.c.bf16 %v2337, %v2336
      %v2353 = vpack.c.bf16 %v2339, %v2338
      %v2354 = vpack.c.bf16 %v2341, %v2340
      %v2355 = vpack.c.bf16 %v2343, %v2342
      %v2356 = vpack.c.bf16 %v2345, %v2344
      %v2357 = vpack.c.bf16 %v2347, %v2346
      %v2358 = vpack.c.bf16 %v2349, %v2348
      %v2359 = vpack.c.bf16 %v2351, %v2350
      %v2368 = vunpack.c.l.b16 %v2352
      %v2369 = vunpack.c.h.b16 %v2352
      %v2370 = vunpack.c.l.b16 %v2353
      %v2371 = vunpack.c.h.b16 %v2353
      %v2372 = vunpack.c.l.b16 %v2354
      %v2373 = vunpack.c.h.b16 %v2354
      %v2374 = vunpack.c.l.b16 %v2355
      %v2375 = vunpack.c.h.b16 %v2355
      %v2376 = vunpack.c.l.b16 %v2356
      %v2377 = vunpack.c.h.b16 %v2356
      %v2378 = vunpack.c.l.b16 %v2357
      %v2379 = vunpack.c.h.b16 %v2357
      %v2380 = vunpack.c.l.b16 %v2358
      %v2381 = vunpack.c.h.b16 %v2358
      %v2382 = vunpack.c.l.b16 %v2359
      %v2383 = vunpack.c.h.b16 %v2359
      %v2384 = vpack.c.b16 %v2368, %v2368
      %v2385 = vpack.c.b16 %v2369, %v2369
      %v2386 = vpack.c.b16 %v2370, %v2370
      %v2387 = vpack.c.b16 %v2371, %v2371
      %v2388 = vpack.c.b16 %v2372, %v2372
      %v2389 = vpack.c.b16 %v2373, %v2373
      %v2390 = vpack.c.b16 %v2374, %v2374
      %v2391 = vpack.c.b16 %v2375, %v2375
      %v2392 = vpack.c.b16 %v2376, %v2376
      %v2393 = vpack.c.b16 %v2377, %v2377
      %v2394 = vpack.c.b16 %v2378, %v2378
      %v2395 = vpack.c.b16 %v2379, %v2379
      %v2396 = vpack.c.b16 %v2380, %v2380
      %v2397 = vpack.c.b16 %v2381, %v2381
      %v2398 = vpack.c.b16 %v2382, %v2382
      %v2399 = vpack.c.b16 %v2383, %v2383
      %vm2416 = vcmask 60416
      %2417 = vst.msk [vmem:[%s203] sm:$0xf] %vm2416, %v2384
      %2418 = vst.msk [vmem:[%s203 + $0x4] sm:$0xf] %vm2416, %v2385
      %2419 = vst.msk [vmem:[%s203 + $0x8] sm:$0xf] %vm2416, %v2386
      %2420 = vst.msk [vmem:[%s203 + $0xc] sm:$0xf] %vm2416, %v2387
      %2421 = vst.msk [vmem:[%s203 + $0x10] sm:$0xf] %vm2416, %v2388
      %2422 = vst.msk [vmem:[%s203 + $0x14] sm:$0xf] %vm2416, %v2389
      %2423 = vst.msk [vmem:[%s203 + $0x18] sm:$0xf] %vm2416, %v2390
      %2424 = vst.msk [vmem:[%s203 + $0x1c] sm:$0xf] %vm2416, %v2391
      %2425 = vst.msk [vmem:[%s203 + $0x20] sm:$0xf] %vm2416, %v2392
      %2426 = vst.msk [vmem:[%s203 + $0x24] sm:$0xf] %vm2416, %v2393
      %2427 = vst.msk [vmem:[%s203 + $0x28] sm:$0xf] %vm2416, %v2394
      %2428 = vst.msk [vmem:[%s203 + $0x2c] sm:$0xf] %vm2416, %v2395
      %2429 = vst.msk [vmem:[%s203 + $0x30] sm:$0xf] %vm2416, %v2396
      %2430 = vst.msk [vmem:[%s203 + $0x34] sm:$0xf] %vm2416, %v2397
      %2431 = vst.msk [vmem:[%s203 + $0x38] sm:$0xf] %vm2416, %v2398
      %2432 = vst.msk [vmem:[%s203 + $0x3c] sm:$0xf] %vm2416, %v2399
      %vm2433 = vcmask 64512
      %v2434 = vsel %vm2433, %v2336, 0.0
      %v2435 = vsel %vm2433, %v2337, 0.0
      %v2436 = vadd.f32 %v2434, %v2435
      %v2437 = vsel %vm2433, %v2338, 0.0
      %v2438 = vadd.f32 %v2436, %v2437
      %v2439 = vsel %vm2433, %v2339, 0.0
      %v2440 = vadd.f32 %v2438, %v2439
      %v2441 = vsel %vm2433, %v2340, 0.0
      %v2442 = vadd.f32 %v2440, %v2441
      %v2443 = vsel %vm2433, %v2341, 0.0
      %v2444 = vadd.f32 %v2442, %v2443
      %v2445 = vsel %vm2433, %v2342, 0.0
      %v2446 = vadd.f32 %v2444, %v2445
      %v2447 = vsel %vm2433, %v2343, 0.0
      %v2448 = vadd.f32 %v2446, %v2447
      %v2449 = vsel %vm2433, %v2344, 0.0
      %v2450 = vadd.f32 %v2448, %v2449
      %v2451 = vsel %vm2433, %v2345, 0.0
      %v2452 = vadd.f32 %v2450, %v2451
      %v2453 = vsel %vm2433, %v2346, 0.0
      %v2454 = vadd.f32 %v2452, %v2453
      %v2455 = vsel %vm2433, %v2347, 0.0
      %v2456 = vadd.f32 %v2454, %v2455
      %v2457 = vsel %vm2433, %v2348, 0.0
      %v2458 = vadd.f32 %v2456, %v2457
      %v2459 = vsel %vm2433, %v2349, 0.0
      %v2460 = vadd.f32 %v2458, %v2459
      %v2461 = vsel %vm2433, %v2350, 0.0
      %v2462 = vadd.f32 %v2460, %v2461
      %v2463 = vsel %vm2433, %v2351, 0.0
      %v2464 = vadd.f32 %v2462, %v2463
      %v2465 = vrot.slane %v2464, 4
      %v2466 = vadd.f32 %v2464, %v2465
      %v2467 = vrot.slane %v2466, 2
      %v2468 = vadd.f32 %v2466, %v2467
      %v2469 = vrot.slane %v2468, 1
      %v2470 = vadd.f32 %v2468, %v2469
      %vm2471 = vcmask 57344
      %2472 = vst.msk [vmem:[%s211] sm:$0x1] %vm2471, %v2470
      %v2473 = vmul.f32 %v2336, %v2336
      %v2474 = vmul.f32 %v2337, %v2337
      %v2475 = vmul.f32 %v2338, %v2338
      %v2476 = vmul.f32 %v2339, %v2339
      %v2477 = vmul.f32 %v2340, %v2340
      %v2478 = vmul.f32 %v2341, %v2341
      %v2479 = vmul.f32 %v2342, %v2342
      %v2480 = vmul.f32 %v2343, %v2343
      %v2481 = vmul.f32 %v2344, %v2344
      %v2482 = vmul.f32 %v2345, %v2345
      %v2483 = vmul.f32 %v2346, %v2346
      %v2484 = vmul.f32 %v2347, %v2347
      %v2485 = vmul.f32 %v2348, %v2348
      %v2486 = vmul.f32 %v2349, %v2349
      %v2487 = vmul.f32 %v2350, %v2350
      %v2488 = vmul.f32 %v2351, %v2351
      %v2489 = vsel %vm2433, %v2473, 0.0
      %v2490 = vsel %vm2433, %v2474, 0.0
      %v2491 = vadd.f32 %v2489, %v2490
      %v2492 = vsel %vm2433, %v2475, 0.0
      %v2493 = vadd.f32 %v2491, %v2492
      %v2494 = vsel %vm2433, %v2476, 0.0
      %v2495 = vadd.f32 %v2493, %v2494
      %v2496 = vsel %vm2433, %v2477, 0.0
      %v2497 = vadd.f32 %v2495, %v2496
      %v2498 = vsel %vm2433, %v2478, 0.0
      %v2499 = vadd.f32 %v2497, %v2498
      %v2500 = vsel %vm2433, %v2479, 0.0
      %v2501 = vadd.f32 %v2499, %v2500
      %v2502 = vsel %vm2433, %v2480, 0.0
      %v2503 = vadd.f32 %v2501, %v2502
      %v2504 = vsel %vm2433, %v2481, 0.0
      %v2505 = vadd.f32 %v2503, %v2504
      %v2506 = vsel %vm2433, %v2482, 0.0
      %v2507 = vadd.f32 %v2505, %v2506
      %v2508 = vsel %vm2433, %v2483, 0.0
      %v2509 = vadd.f32 %v2507, %v2508
      %v2510 = vsel %vm2433, %v2484, 0.0
      %v2511 = vadd.f32 %v2509, %v2510
      %v2512 = vsel %vm2433, %v2485, 0.0
      %v2513 = vadd.f32 %v2511, %v2512
      %v2514 = vsel %vm2433, %v2486, 0.0
      %v2515 = vadd.f32 %v2513, %v2514
      %v2516 = vsel %vm2433, %v2487, 0.0
      %v2517 = vadd.f32 %v2515, %v2516
      %v2518 = vsel %vm2433, %v2488, 0.0
      %v2519 = vadd.f32 %v2517, %v2518
      %v2520 = vrot.slane %v2519, 4
      %v2521 = vadd.f32 %v2519, %v2520
      %v2522 = vrot.slane %v2521, 2
      %v2523 = vadd.f32 %v2521, %v2522
      %v2524 = vrot.slane %v2523, 1
      %v2525 = vadd.f32 %v2523, %v2524
      %2526 = vst.msk [vmem:[%s211 + $0x1] sm:$0x1] %vm2471, %v2525
      %s2527 = smul.u32 %s19, 2
      %s2528 = sadd.s32 %s2527, %s20
      %p2529 = scmp.lt.s32.totalorder %s2528, 3
      %s2530 = scalar_select %p2529, %s2528, 3
      %s2531 = smul.addr %s2530, 16
      %s2532 = smul.addr %s2531, 4
      %s2533 = scalar_lea.vmem %s2, %s2532
      %s2534 = smul.u32 %s19, 2
      %s2535 = sadd.s32 %s2534, %s20
      %p2536 = scmp.lt.s32.totalorder %s2535, 3
      %s2537 = scalar_select %p2536, %s2535, 3
      %s2538 = smul.addr %s2537, 2
      %s2539 = scalar_lea.vmem %s3, %s2538
      // Predicated region
      $region29: #{atrous_module_forward.1} parent=27 // pred_check
        %p2540 = pneg %p96
      $region30: #{atrous_module_forward.1} parent=27 // pred_check_branch
        %2542 = sbr.rel (%p2540) target = $region32
      $region31: #{atrous_module_forward.1} parent=27 // pred_region
        %s2543 = smul.u32 %s19, 2
        %s2544 = sadd.s32 %s2543, %s20
      $region32: #{atrous_module_forward.1} parent=27 // pred_fallthru
        _
      // Predicated region
      $region33: #{atrous_module_forward.1} parent=27 // pred_check
        %p2545 = pneg %p126
      $region34: #{atrous_module_forward.1} parent=27 // pred_check_branch
        %2547 = sbr.rel (%p2545) target = $region36
      $region35: #{atrous_module_forward.1} parent=27 // pred_region
        %s2548 = smul.u32 %s19, 2
        %s2549 = sadd.s32 %s2548, %s20
      $region36: #{atrous_module_forward.1} parent=27 // pred_fallthru
        _
    $region28: #{atrous_module_forward.1} parent=5 // pred_fallthru
      _
    %p2550 = scmp.le.s32.totalorder 2, %s10
    // Predicated region
    $region37: #{atrous_module_forward.1} parent=5 // pred_check
      %p2551 = pneg %p2550
    $region38: #{atrous_module_forward.1} parent=5 // pred_check_branch
      %2553 = sbr.rel (%p2551) target = $region40
    $region39: #{atrous_module_forward.1} parent=5 // pred_region
      %s2554 = ssub.s32 %s10, 2
      // Predicated region
      $region41: #{atrous_module_forward.1} parent=39 // pred_check
        %p2555 = pneg %p102
      $region42: #{atrous_module_forward.1} parent=39 // pred_check_branch
        %2557 = sbr.rel (%p2555) target = $region44
      $region43: #{atrous_module_forward.1} parent=39 // pred_region
        %s2558 = smul.u32 %s21, 2
        %s2559 = sadd.s32 %s2558, %s22
        %p2560 = scmp.lt.s32.totalorder %s2559, 3
        %s2561 = scalar_select %p2560, %s2559, 3
        %s2562 = smul.addr %s2561, 16
        %s2563 = smul.addr %s2562, 4
        %s2564 = scalar_lea.vmem %s2, %s2563
      $region44: #{atrous_module_forward.1} parent=39 // pred_fallthru
        _
      // Predicated region
      $region45: #{atrous_module_forward.1} parent=39 // pred_check
        %p2565 = pneg %p132
      $region46: #{atrous_module_forward.1} parent=39 // pred_check_branch
        %2567 = sbr.rel (%p2565) target = $region48
      $region47: #{atrous_module_forward.1} parent=39 // pred_region
        %s2568 = smul.u32 %s21, 2
        %s2569 = sadd.s32 %s2568, %s22
        %p2570 = scmp.lt.s32.totalorder %s2569, 3
        %s2571 = scalar_select %p2570, %s2569, 3
        %s2572 = smul.addr %s2571, 2
        %s2573 = scalar_lea.vmem %s3, %s2572
      $region48: #{atrous_module_forward.1} parent=39 // pred_fallthru
        _
    $region40: #{atrous_module_forward.1} parent=5 // pred_fallthru
      _
  $region6: #{atrous_module_forward.1} parent=0 // loop_footer
    %s14 = sadd.s32 1, %s10
  $region7: #{atrous_module_forward.1} parent=0 // loop_footer_branch
    %9 = sbr.rel target = $region3
  $region8: #{atrous_module_forward.1} parent=0 // loop_exit
    _

</llo_original>
